<compile_context>
chip_gen: v7x
topology: tpu7x:2x2x1
jax: 0.10.0
libtpu: 0.0.40
codegen_flags: <defaults>
</compile_context>

<pallas_src>
import functools

import jax
import jax.numpy as jnp
import numpy as np
from jax.experimental import pallas as pl
from jax.experimental.pallas import tpu as pltpu


# ----------------------------------------------------------------------------
# Fused kernel: edge construction + multi-head attention for ONE batch element.
# ----------------------------------------------------------------------------
def ece_kernel(num_heads, E,
               x_ref, si_ref, sj_ref,
               wac_ref, b12_ref,
               wq_ref, bq_ref,
               wkv_ref, bkv_ref,
               wo_ref, bo_ref,
               out_ref):
    f32 = jnp.float32
    x = x_ref[...]                                       # (N, H)
    N, H = x.shape
    hd = H // num_heads
    Ep = si_ref.shape[0]                                 # padded edge count

    # ---- build_graph with FC hoisted before pair expansion ----------------
    #   edge = relu((x_i - x_j)@w1 + x_j@w2 + b1 + b2)
    #        = relu(A_i + C_j + b12),  A = x@w1,  C = x@(w2 - w1)
    ac = jnp.dot(x, wac_ref[...], preferred_element_type=f32)       # (N, 2H)
    a = ac[:, :H]
    c = ac[:, H:]
    edge = jnp.maximum(
        jnp.dot(si_ref[...], a, preferred_element_type=f32)
        + jnp.dot(sj_ref[...], c, preferred_element_type=f32)
        + b12_ref[...],
        0.0)                                                         # (Ep, H)

    # ---- attention projections (K|V weights packed; scale folded into q) --
    scale = f32(1.0 / np.sqrt(hd))
    q = (jnp.dot(x, wq_ref[...], preferred_element_type=f32)
         + bq_ref[...]) * scale                                      # (N, H)
    kv = jnp.dot(edge, wkv_ref[...], preferred_element_type=f32) \
        + bkv_ref[...]                                               # (Ep, 2H)
    k = kv[:, :H]
    v = kv[:, H:]

    # head-major stacking via static lane slices -> leading batch dim
    qh = jnp.stack([q[:, h * hd:(h + 1) * hd] for h in range(num_heads)], 0)
    kh = jnp.stack([k[:, h * hd:(h + 1) * hd] for h in range(num_heads)], 0)
    vh = jnp.stack([v[:, h * hd:(h + 1) * hd] for h in range(num_heads)], 0)

    # padded-edge additive bias, built once for all heads / queries
    col = jax.lax.broadcasted_iota(jnp.int32, (1, Ep), 1)
    bias = jnp.where(col < E, 0.0, -1e30).astype(f32)                # (1, Ep)

    # batched-over-heads attention
    s = jnp.einsum('hqd,hkd->hqk', qh, kh,
                   preferred_element_type=f32) + bias                # (nh, N, Ep)
    s = s - jnp.max(s, axis=-1, keepdims=True)
    p = jnp.exp(s)
    p = p / jnp.sum(p, axis=-1, keepdims=True)                       # exact softmax
    oh = jnp.einsum('hqk,hkd->hqd', p, vh,
                    preferred_element_type=f32)                      # (nh, N, hd)

    # output projection with the head concat folded into per-head matmuls
    wo = wo_ref[...]                                                 # (H, H)
    acc = jnp.zeros((N, H), f32)
    for h in range(num_heads):                                       # static unroll
        acc = acc + jnp.dot(oh[h], wo[h * hd:(h + 1) * hd, :],
                            preferred_element_type=f32)
    out_ref[...] = acc + bo_ref[...]


# ----------------------------------------------------------------------------
# Wrapper
# ----------------------------------------------------------------------------
def ego_context_extractor(X, params, num_block_padding, num_heads):
    B, N, H = X.shape
    assert N == num_block_padding
    assert N >= 2, "need at least one strictly-upper-triangular pair"
    assert H % num_heads == 0

    # strict upper-triangle pairs, row-major (same order as the torch bool mask)
    i_idx, j_idx = np.triu_indices(N, k=1)
    E = int(i_idx.shape[0])
    Ep = ((E + 7) // 8) * 8                      # sublane-aligned edge count

    # (Ep, N) selection matrices -- batch handled by the grid, no kron
    Si = np.zeros((Ep, N), np.float32)
    Si[np.arange(E), i_idx] = 1.0
    Sj = np.zeros((Ep, N), np.float32)
    Sj[np.arange(E), j_idx] = 1.0
    si = jnp.asarray(Si)
    sj = jnp.asarray(Sj)

    # packed weights:
    #   fc hoist: x @ [w1 | (w2 - w1)]  -> A, C ; bias b12 = b1 + b2
    #   K|V: one (H, 2H) matmul
    wac = jnp.concatenate([params["w1"], params["w2"] - params["w1"]], axis=1)
    b12 = (params["b1"] + params["b2"]).reshape(1, H)
    wkv = jnp.concatenate([params["wk"], params["wv"]], axis=1)
    bkv = jnp.concatenate([params["bk"], params["bv"]]).reshape(1, 2 * H)

    def full(shape):                              # grid-invariant full block
        return pl.BlockSpec(shape, lambda b: (0,) * len(shape))

    per_batch = pl.BlockSpec((None, N, H), lambda b: (b, 0, 0))

    kern = functools.partial(ece_kernel, num_heads, E)
    out = pl.pallas_call(
        kern,
        out_shape=jax.ShapeDtypeStruct((B, N, H), jnp.float32),
        grid=(B,),
        in_specs=[
            per_batch,                            # x[b]
            full((Ep, N)), full((Ep, N)),         # Si, Sj
            full((H, 2 * H)), full((1, H)),       # wac, b12
            full((H, H)), full((1, H)),           # wq, bq
            full((H, 2 * H)), full((1, 2 * H)),   # wkv, bkv
            full((H, H)), full((1, H)),           # wo, bo
        ],
        out_specs=per_batch,
        compiler_params=pltpu.CompilerParams(
            dimension_semantics=("parallel",)),   # batch-parallel (2 TCs on v7x)
    )(X, si, sj,
      wac, b12,
      params["wq"], params["bq"].reshape(1, H),
      wkv, bkv,
      params["wo"], params["bo"].reshape(1, H))

    return out


# ----------------------------------------------------------------------------
# Pure-JAX reference (for correctness check)
# ----------------------------------------------------------------------------
def reference(X, params, num_block_padding, num_heads):
    B, N, H = X.shape
    i_idx, j_idx = np.triu_indices(num_block_padding, k=1)
    xi = X[:, i_idx, :]
    xj = X[:, j_idx, :]
    edge = jax.nn.relu((xi - xj) @ params["w1"] + params["b1"]
                       + xj @ params["w2"] + params["b2"])
    q = X @ params["wq"] + params["bq"]
    k = edge @ params["wk"] + params["bk"]
    v = edge @ params["wv"] + params["bv"]
    hd = H // num_heads
    q = q.reshape(B, N, num_heads, hd).transpose(0, 2, 1, 3)
    k = k.reshape(B, -1, num_heads, hd).transpose(0, 2, 1, 3)
    v = v.reshape(B, -1, num_heads, hd).transpose(0, 2, 1, 3)
    s = jnp.einsum("bhqd,bhkd->bhqk", q, k) / jnp.sqrt(jnp.float32(hd))
    p = jax.nn.softmax(s, axis=-1)
    o = jnp.einsum("bhqk,bhkd->bhqd", p, v).transpose(0, 2, 1, 3).reshape(B, N, H)
    return o @ params["wo"] + params["bo"]


if __name__ == "__main__":
    B = 2                     # batch
    N = 8                     # num_block_padding (num_nodes)
    H = 32                    # num_hidden
    NUM_HEADS = 4

    keys = jax.random.split(jax.random.PRNGKey(0), 13)
    scale = 0.1
    params = {
        "w1": scale * jax.random.normal(keys[0], (H, H), jnp.float32),
        "b1": scale * jax.random.normal(keys[1], (H,), jnp.float32),
        "w2": scale * jax.random.normal(keys[2], (H, H), jnp.float32),
        "b2": scale * jax.random.normal(keys[3], (H,), jnp.float32),
        "wq": scale * jax.random.normal(keys[4], (H, H), jnp.float32),
        "bq": scale * jax.random.normal(keys[5], (H,), jnp.float32),
        "wk": scale * jax.random.normal(keys[6], (H, H), jnp.float32),
        "bk": scale * jax.random.normal(keys[7], (H,), jnp.float32),
        "wv": scale * jax.random.normal(keys[8], (H, H), jnp.float32),
        "bv": scale * jax.random.normal(keys[9], (H,), jnp.float32),
        "wo": scale * jax.random.normal(keys[10], (H, H), jnp.float32),
        "bo": scale * jax.random.normal(keys[11], (H,), jnp.float32),
    }
    X = jax.random.normal(keys[12], (B, N, H), jnp.float32)

    out = ego_context_extractor(X, params, num_block_padding=N, num_heads=NUM_HEADS)
    out = jax.block_until_ready(out)

    ref = jax.block_until_ready(reference(X, params, N, NUM_HEADS))
    np.testing.assert_allclose(np.asarray(out), np.asarray(ref),
                               atol=1e-4, rtol=1e-4)

    print("KERNEL_OK")
</pallas_src>

<mosaic_0001>
module attributes {stable_mosaic.version = 11 : i64} {
  func.func @ece_kernel(%arg0: i32, %arg1: memref<1x8x32xf32, #tpu.memory_space<vmem>>, %arg2: memref<32x8xf32, #tpu.memory_space<vmem>>, %arg3: memref<32x8xf32, #tpu.memory_space<vmem>>, %arg4: memref<32x64xf32, #tpu.memory_space<vmem>>, %arg5: memref<1x32xf32, #tpu.memory_space<vmem>>, %arg6: memref<32x32xf32, #tpu.memory_space<vmem>>, %arg7: memref<1x32xf32, #tpu.memory_space<vmem>>, %arg8: memref<32x64xf32, #tpu.memory_space<vmem>>, %arg9: memref<1x64xf32, #tpu.memory_space<vmem>>, %arg10: memref<32x32xf32, #tpu.memory_space<vmem>>, %arg11: memref<1x32xf32, #tpu.memory_space<vmem>>, %arg12: memref<1x8x32xf32, #tpu.memory_space<vmem>>) attributes {dimension_semantics = [#tpu.dimension_semantics<parallel>], iteration_bounds = array<i64: 2>, scalar_prefetch = 0 : i64, scratch_operands = 0 : i64, tpu.core_type = #tpu.core_type<tc>, window_params = [{transform_indices = @transform_0, window_bounds = array<i64: 1, 8, 32>}, {pipeline_mode = #tpu.pipeline_mode<synchronous>, transform_indices = @transform_1, window_bounds = array<i64: 32, 8>}, {pipeline_mode = #tpu.pipeline_mode<synchronous>, transform_indices = @transform_2, window_bounds = array<i64: 32, 8>}, {pipeline_mode = #tpu.pipeline_mode<synchronous>, transform_indices = @transform_3, window_bounds = array<i64: 32, 64>}, {pipeline_mode = #tpu.pipeline_mode<synchronous>, transform_indices = @transform_4, window_bounds = array<i64: 1, 32>}, {pipeline_mode = #tpu.pipeline_mode<synchronous>, transform_indices = @transform_5, window_bounds = array<i64: 32, 32>}, {pipeline_mode = #tpu.pipeline_mode<synchronous>, transform_indices = @transform_6, window_bounds = array<i64: 1, 32>}, {pipeline_mode = #tpu.pipeline_mode<synchronous>, transform_indices = @transform_7, window_bounds = array<i64: 32, 64>}, {pipeline_mode = #tpu.pipeline_mode<synchronous>, transform_indices = @transform_8, window_bounds = array<i64: 1, 64>}, {pipeline_mode = #tpu.pipeline_mode<synchronous>, transform_indices = @transform_9, window_bounds = array<i64: 32, 32>}, {pipeline_mode = #tpu.pipeline_mode<synchronous>, transform_indices = @transform_10, window_bounds = array<i64: 1, 32>}, {transform_indices = @transform_11, window_bounds = array<i64: 1, 8, 32>}]} {
    %c0 = arith.constant 0 : index
    %c0_0 = arith.constant 0 : index
    %c0_1 = arith.constant 0 : index
    %0 = vector.load %arg1[%c0, %c0_0, %c0_1] : memref<1x8x32xf32, #tpu.memory_space<vmem>>, vector<1x8x32xf32>
    %1 = vector.shape_cast %0 : vector<1x8x32xf32> to vector<8x32xf32>
    %c0_2 = arith.constant 0 : index
    %c0_3 = arith.constant 0 : index
    %2 = vector.load %arg4[%c0_2, %c0_3] : memref<32x64xf32, #tpu.memory_space<vmem>>, vector<32x64xf32>
    %cst = arith.constant dense<0.000000e+00> : vector<8x64xf32>
    %3 = tpu.matmul %1, %2, %cst {dimension_numbers = #tpu.dot_dimension_numbers<[1], [0], [0], [1], [0, 0, 1, 1], [], []>} : vector<8x32xf32>, vector<32x64xf32>, vector<8x64xf32> -> vector<8x64xf32>
    %4 = vector.extract_strided_slice %3 {offsets = [0, 0], sizes = [8, 32], strides = [1, 1]} : vector<8x64xf32> to vector<8x32xf32>
    %5 = vector.extract_strided_slice %3 {offsets = [0, 32], sizes = [8, 32], strides = [1, 1]} : vector<8x64xf32> to vector<8x32xf32>
    %c0_4 = arith.constant 0 : index
    %c0_5 = arith.constant 0 : index
    %6 = vector.load %arg2[%c0_4, %c0_5] : memref<32x8xf32, #tpu.memory_space<vmem>>, vector<32x8xf32>
    %cst_6 = arith.constant dense<0.000000e+00> : vector<32x32xf32>
    %7 = tpu.matmul %6, %4, %cst_6 {dimension_numbers = #tpu.dot_dimension_numbers<[1], [0], [0], [1], [0, 0, 1, 1], [], []>} : vector<32x8xf32>, vector<8x32xf32>, vector<32x32xf32> -> vector<32x32xf32>
    %c0_7 = arith.constant 0 : index
    %c0_8 = arith.constant 0 : index
    %8 = vector.load %arg3[%c0_7, %c0_8] : memref<32x8xf32, #tpu.memory_space<vmem>>, vector<32x8xf32>
    %cst_9 = arith.constant dense<0.000000e+00> : vector<32x32xf32>
    %9 = tpu.matmul %8, %5, %cst_9 {dimension_numbers = #tpu.dot_dimension_numbers<[1], [0], [0], [1], [0, 0, 1, 1], [], []>} : vector<32x8xf32>, vector<8x32xf32>, vector<32x32xf32> -> vector<32x32xf32>
    %10 = arith.addf %7, %9 : vector<32x32xf32>
    %c0_10 = arith.constant 0 : index
    %c0_11 = arith.constant 0 : index
    %11 = vector.load %arg5[%c0_10, %c0_11] : memref<1x32xf32, #tpu.memory_space<vmem>>, vector<1x32xf32>
    %12 = vector.broadcast %11 : vector<1x32xf32> to vector<32x32xf32>
    %13 = arith.addf %10, %12 : vector<32x32xf32>
    %cst_12 = arith.constant 0.000000e+00 : f32
    %14 = vector.broadcast %cst_12 : f32 to vector<32x32xf32>
    %15 = arith.maximumf %13, %14 : vector<32x32xf32>
    %c0_13 = arith.constant 0 : index
    %c0_14 = arith.constant 0 : index
    %16 = vector.load %arg6[%c0_13, %c0_14] : memref<32x32xf32, #tpu.memory_space<vmem>>, vector<32x32xf32>
    %cst_15 = arith.constant dense<0.000000e+00> : vector<8x32xf32>
    %17 = tpu.matmul %1, %16, %cst_15 {dimension_numbers = #tpu.dot_dimension_numbers<[1], [0], [0], [1], [0, 0, 1, 1], [], []>} : vector<8x32xf32>, vector<32x32xf32>, vector<8x32xf32> -> vector<8x32xf32>
    %c0_16 = arith.constant 0 : index
    %c0_17 = arith.constant 0 : index
    %18 = vector.load %arg7[%c0_16, %c0_17] : memref<1x32xf32, #tpu.memory_space<vmem>>, vector<1x32xf32>
    %19 = vector.broadcast %18 : vector<1x32xf32> to vector<8x32xf32>
    %20 = arith.addf %17, %19 : vector<8x32xf32>
    %cst_18 = arith.constant 0.353553385 : f32
    %21 = vector.broadcast %cst_18 : f32 to vector<8x32xf32>
    %22 = arith.mulf %20, %21 : vector<8x32xf32>
    %c0_19 = arith.constant 0 : index
    %c0_20 = arith.constant 0 : index
    %23 = vector.load %arg8[%c0_19, %c0_20] : memref<32x64xf32, #tpu.memory_space<vmem>>, vector<32x64xf32>
    %cst_21 = arith.constant dense<0.000000e+00> : vector<32x64xf32>
    %24 = tpu.matmul %15, %23, %cst_21 {dimension_numbers = #tpu.dot_dimension_numbers<[1], [0], [0], [1], [0, 0, 1, 1], [], []>} : vector<32x32xf32>, vector<32x64xf32>, vector<32x64xf32> -> vector<32x64xf32>
    %c0_22 = arith.constant 0 : index
    %c0_23 = arith.constant 0 : index
    %25 = vector.load %arg9[%c0_22, %c0_23] : memref<1x64xf32, #tpu.memory_space<vmem>>, vector<1x64xf32>
    %26 = vector.broadcast %25 : vector<1x64xf32> to vector<32x64xf32>
    %27 = arith.addf %24, %26 : vector<32x64xf32>
    %28 = vector.extract_strided_slice %27 {offsets = [0, 0], sizes = [32, 32], strides = [1, 1]} : vector<32x64xf32> to vector<32x32xf32>
    %29 = vector.extract_strided_slice %27 {offsets = [0, 32], sizes = [32, 32], strides = [1, 1]} : vector<32x64xf32> to vector<32x32xf32>
    %30 = vector.extract_strided_slice %22 {offsets = [0, 0], sizes = [8, 8], strides = [1, 1]} : vector<8x32xf32> to vector<8x8xf32>
    %31 = vector.extract_strided_slice %22 {offsets = [0, 8], sizes = [8, 8], strides = [1, 1]} : vector<8x32xf32> to vector<8x8xf32>
    %32 = vector.extract_strided_slice %22 {offsets = [0, 16], sizes = [8, 8], strides = [1, 1]} : vector<8x32xf32> to vector<8x8xf32>
    %33 = vector.extract_strided_slice %22 {offsets = [0, 24], sizes = [8, 8], strides = [1, 1]} : vector<8x32xf32> to vector<8x8xf32>
    %34 = vector.shape_cast %30 : vector<8x8xf32> to vector<1x8x8xf32>
    %35 = vector.shape_cast %31 : vector<8x8xf32> to vector<1x8x8xf32>
    %36 = vector.shape_cast %32 : vector<8x8xf32> to vector<1x8x8xf32>
    %37 = vector.shape_cast %33 : vector<8x8xf32> to vector<1x8x8xf32>
    %38 = tpu.concatenate %34, %35, %36, %37 in 0 : vector<1x8x8xf32>, vector<1x8x8xf32>, vector<1x8x8xf32>, vector<1x8x8xf32> -> vector<4x8x8xf32>
    %39 = vector.extract_strided_slice %28 {offsets = [0, 0], sizes = [32, 8], strides = [1, 1]} : vector<32x32xf32> to vector<32x8xf32>
    %40 = vector.extract_strided_slice %28 {offsets = [0, 8], sizes = [32, 8], strides = [1, 1]} : vector<32x32xf32> to vector<32x8xf32>
    %41 = vector.extract_strided_slice %28 {offsets = [0, 16], sizes = [32, 8], strides = [1, 1]} : vector<32x32xf32> to vector<32x8xf32>
    %42 = vector.extract_strided_slice %28 {offsets = [0, 24], sizes = [32, 8], strides = [1, 1]} : vector<32x32xf32> to vector<32x8xf32>
    %43 = vector.shape_cast %39 : vector<32x8xf32> to vector<1x32x8xf32>
    %44 = vector.shape_cast %40 : vector<32x8xf32> to vector<1x32x8xf32>
    %45 = vector.shape_cast %41 : vector<32x8xf32> to vector<1x32x8xf32>
    %46 = vector.shape_cast %42 : vector<32x8xf32> to vector<1x32x8xf32>
    %47 = tpu.concatenate %43, %44, %45, %46 in 0 : vector<1x32x8xf32>, vector<1x32x8xf32>, vector<1x32x8xf32>, vector<1x32x8xf32> -> vector<4x32x8xf32>
    %48 = vector.extract_strided_slice %29 {offsets = [0, 0], sizes = [32, 8], strides = [1, 1]} : vector<32x32xf32> to vector<32x8xf32>
    %49 = vector.extract_strided_slice %29 {offsets = [0, 8], sizes = [32, 8], strides = [1, 1]} : vector<32x32xf32> to vector<32x8xf32>
    %50 = vector.extract_strided_slice %29 {offsets = [0, 16], sizes = [32, 8], strides = [1, 1]} : vector<32x32xf32> to vector<32x8xf32>
    %51 = vector.extract_strided_slice %29 {offsets = [0, 24], sizes = [32, 8], strides = [1, 1]} : vector<32x32xf32> to vector<32x8xf32>
    %52 = vector.shape_cast %48 : vector<32x8xf32> to vector<1x32x8xf32>
    %53 = vector.shape_cast %49 : vector<32x8xf32> to vector<1x32x8xf32>
    %54 = vector.shape_cast %50 : vector<32x8xf32> to vector<1x32x8xf32>
    %55 = vector.shape_cast %51 : vector<32x8xf32> to vector<1x32x8xf32>
    %56 = tpu.concatenate %52, %53, %54, %55 in 0 : vector<1x32x8xf32>, vector<1x32x8xf32>, vector<1x32x8xf32>, vector<1x32x8xf32> -> vector<4x32x8xf32>
    %57 = tpu.iota {dimensions = array<i32: 1>} : vector<1x32xi32>
    %c28_i32 = arith.constant 28 : i32
    %58 = vector.broadcast %c28_i32 : i32 to vector<1x32xi32>
    %59 = arith.cmpi slt, %57, %58 : vector<1x32xi32>
    %cst_24 = arith.constant 0.000000e+00 : f32
    %cst_25 = arith.constant -1.000000e+30 : f32
    %60 = vector.broadcast %cst_24 : f32 to vector<1x32xf32>
    %61 = vector.broadcast %cst_25 : f32 to vector<1x32xf32>
    %62 = arith.select %59, %60, %61 : vector<1x32xi1>, vector<1x32xf32>
    "tpu.trace_start"() <{level = 10 : i32, message = "hqd,hkd->hqk"}> : () -> ()
    %cst_26 = arith.constant dense<0.000000e+00> : vector<4x8x32xf32>
    %63 = tpu.matmul %38, %47, %cst_26 {dimension_numbers = #tpu.dot_dimension_numbers<[2], [2], [1], [1], [0, 0, 0, 1, 1, 1], [0], [0]>} : vector<4x8x8xf32>, vector<4x32x8xf32>, vector<4x8x32xf32> -> vector<4x8x32xf32>
    "tpu.trace_stop"() : () -> ()
    %64 = vector.shape_cast %62 : vector<1x32xf32> to vector<1x1x32xf32>
    %65 = vector.broadcast %64 : vector<1x1x32xf32> to vector<4x8x32xf32>
    %66 = arith.addf %63, %65 : vector<4x8x32xf32>
    %cst_27 = arith.constant dense<0xFF800000> : vector<4x8xf32>
    %67 = vector.multi_reduction <maximumf>, %66, %cst_27 [2] : vector<4x8x32xf32> to vector<4x8xf32>
    %68 = vector.shape_cast %67 : vector<4x8xf32> to vector<4x8x1xf32>
    %69 = vector.broadcast %68 : vector<4x8x1xf32> to vector<4x8x32xf32>
    %70 = arith.subf %66, %69 : vector<4x8x32xf32>
    %71 = math.exp %70 : vector<4x8x32xf32>
    %cst_28 = arith.constant dense<0.000000e+00> : vector<4x8xf32>
    %72 = vector.multi_reduction <add>, %71, %cst_28 [2] : vector<4x8x32xf32> to vector<4x8xf32>
    %73 = vector.shape_cast %72 : vector<4x8xf32> to vector<4x8x1xf32>
    %74 = vector.broadcast %73 : vector<4x8x1xf32> to vector<4x8x32xf32>
    %75 = arith.divf %71, %74 : vector<4x8x32xf32>
    "tpu.trace_start"() <{level = 10 : i32, message = "hqk,hkd->hqd"}> : () -> ()
    %cst_29 = arith.constant dense<0.000000e+00> : vector<4x8x8xf32>
    %76 = tpu.matmul %75, %56, %cst_29 {dimension_numbers = #tpu.dot_dimension_numbers<[2], [1], [1], [2], [0, 0, 0, 1, 1, 2], [0], [0]>} : vector<4x8x32xf32>, vector<4x32x8xf32>, vector<4x8x8xf32> -> vector<4x8x8xf32>
    "tpu.trace_stop"() : () -> ()
    %c0_30 = arith.constant 0 : index
    %c0_31 = arith.constant 0 : index
    %77 = vector.load %arg10[%c0_30, %c0_31] : memref<32x32xf32, #tpu.memory_space<vmem>>, vector<32x32xf32>
    %cst_32 = arith.constant 0.000000e+00 : f32
    %78 = vector.broadcast %cst_32 : f32 to vector<8x32xf32>
    %79 = vector.extract_strided_slice %76 {offsets = [0, 0, 0], sizes = [1, 8, 8], strides = [1, 1, 1]} : vector<4x8x8xf32> to vector<1x8x8xf32>
    %80 = vector.shape_cast %79 : vector<1x8x8xf32> to vector<8x8xf32>
    %81 = vector.extract_strided_slice %77 {offsets = [0, 0], sizes = [8, 32], strides = [1, 1]} : vector<32x32xf32> to vector<8x32xf32>
    %cst_33 = arith.constant dense<0.000000e+00> : vector<8x32xf32>
    %82 = tpu.matmul %80, %81, %cst_33 {dimension_numbers = #tpu.dot_dimension_numbers<[1], [0], [0], [1], [0, 0, 1, 1], [], []>} : vector<8x8xf32>, vector<8x32xf32>, vector<8x32xf32> -> vector<8x32xf32>
    %83 = arith.addf %78, %82 : vector<8x32xf32>
    %84 = vector.extract_strided_slice %76 {offsets = [1, 0, 0], sizes = [1, 8, 8], strides = [1, 1, 1]} : vector<4x8x8xf32> to vector<1x8x8xf32>
    %85 = vector.shape_cast %84 : vector<1x8x8xf32> to vector<8x8xf32>
    %86 = vector.extract_strided_slice %77 {offsets = [8, 0], sizes = [8, 32], strides = [1, 1]} : vector<32x32xf32> to vector<8x32xf32>
    %cst_34 = arith.constant dense<0.000000e+00> : vector<8x32xf32>
    %87 = tpu.matmul %85, %86, %cst_34 {dimension_numbers = #tpu.dot_dimension_numbers<[1], [0], [0], [1], [0, 0, 1, 1], [], []>} : vector<8x8xf32>, vector<8x32xf32>, vector<8x32xf32> -> vector<8x32xf32>
    %88 = arith.addf %83, %87 : vector<8x32xf32>
    %89 = vector.extract_strided_slice %76 {offsets = [2, 0, 0], sizes = [1, 8, 8], strides = [1, 1, 1]} : vector<4x8x8xf32> to vector<1x8x8xf32>
    %90 = vector.shape_cast %89 : vector<1x8x8xf32> to vector<8x8xf32>
    %91 = vector.extract_strided_slice %77 {offsets = [16, 0], sizes = [8, 32], strides = [1, 1]} : vector<32x32xf32> to vector<8x32xf32>
    %cst_35 = arith.constant dense<0.000000e+00> : vector<8x32xf32>
    %92 = tpu.matmul %90, %91, %cst_35 {dimension_numbers = #tpu.dot_dimension_numbers<[1], [0], [0], [1], [0, 0, 1, 1], [], []>} : vector<8x8xf32>, vector<8x32xf32>, vector<8x32xf32> -> vector<8x32xf32>
    %93 = arith.addf %88, %92 : vector<8x32xf32>
    %94 = vector.extract_strided_slice %76 {offsets = [3, 0, 0], sizes = [1, 8, 8], strides = [1, 1, 1]} : vector<4x8x8xf32> to vector<1x8x8xf32>
    %95 = vector.shape_cast %94 : vector<1x8x8xf32> to vector<8x8xf32>
    %96 = vector.extract_strided_slice %77 {offsets = [24, 0], sizes = [8, 32], strides = [1, 1]} : vector<32x32xf32> to vector<8x32xf32>
    %cst_36 = arith.constant dense<0.000000e+00> : vector<8x32xf32>
    %97 = tpu.matmul %95, %96, %cst_36 {dimension_numbers = #tpu.dot_dimension_numbers<[1], [0], [0], [1], [0, 0, 1, 1], [], []>} : vector<8x8xf32>, vector<8x32xf32>, vector<8x32xf32> -> vector<8x32xf32>
    %98 = arith.addf %93, %97 : vector<8x32xf32>
    %c0_37 = arith.constant 0 : index
    %c0_38 = arith.constant 0 : index
    %99 = vector.load %arg11[%c0_37, %c0_38] : memref<1x32xf32, #tpu.memory_space<vmem>>, vector<1x32xf32>
    %100 = vector.broadcast %99 : vector<1x32xf32> to vector<8x32xf32>
    %101 = arith.addf %98, %100 : vector<8x32xf32>
    %c0_39 = arith.constant 0 : index
    %c0_40 = arith.constant 0 : index
    %c0_41 = arith.constant 0 : index
    %102 = vector.load %arg12[%c0_39, %c0_40, %c0_41] : memref<1x8x32xf32, #tpu.memory_space<vmem>>, vector<1x8x32xf32>
    %103 = vector.shape_cast %102 : vector<1x8x32xf32> to vector<8x32xf32>
    %104 = vector.shape_cast %101 : vector<8x32xf32> to vector<1x8x32xf32>
    tpu.vector_store %arg12[%c0_39, %c0_40, %c0_41], %104 {strides = array<i32>} : memref<1x8x32xf32, #tpu.memory_space<vmem>>, vector<1x8x32xf32>,
    return
  }
  func.func @transform_0(%arg0: i32) -> (i32, i32, i32) {
    %c0_i32 = arith.constant 0 : i32
    %c0_i32_0 = arith.constant 0 : i32
    %c0_i32_1 = arith.constant 0 : i32
    return %arg0, %c0_i32, %c0_i32_0 : i32, i32, i32
  }
  func.func @transform_1(%arg0: i32) -> (i32, i32) {
    %c0_i32 = arith.constant 0 : i32
    %c0_i32_0 = arith.constant 0 : i32
    %c0_i32_1 = arith.constant 0 : i32
    return %c0_i32, %c0_i32_0 : i32, i32
  }
  func.func @transform_2(%arg0: i32) -> (i32, i32) {
    %c0_i32 = arith.constant 0 : i32
    %c0_i32_0 = arith.constant 0 : i32
    %c0_i32_1 = arith.constant 0 : i32
    return %c0_i32, %c0_i32_0 : i32, i32
  }
  func.func @transform_3(%arg0: i32) -> (i32, i32) {
    %c0_i32 = arith.constant 0 : i32
    %c0_i32_0 = arith.constant 0 : i32
    %c0_i32_1 = arith.constant 0 : i32
    return %c0_i32, %c0_i32_0 : i32, i32
  }
  func.func @transform_4(%arg0: i32) -> (i32, i32) {
    %c0_i32 = arith.constant 0 : i32
    %c0_i32_0 = arith.constant 0 : i32
    %c0_i32_1 = arith.constant 0 : i32
    return %c0_i32, %c0_i32_0 : i32, i32
  }
  func.func @transform_5(%arg0: i32) -> (i32, i32) {
    %c0_i32 = arith.constant 0 : i32
    %c0_i32_0 = arith.constant 0 : i32
    %c0_i32_1 = arith.constant 0 : i32
    return %c0_i32, %c0_i32_0 : i32, i32
  }
  func.func @transform_6(%arg0: i32) -> (i32, i32) {
    %c0_i32 = arith.constant 0 : i32
    %c0_i32_0 = arith.constant 0 : i32
    %c0_i32_1 = arith.constant 0 : i32
    return %c0_i32, %c0_i32_0 : i32, i32
  }
  func.func @transform_7(%arg0: i32) -> (i32, i32) {
    %c0_i32 = arith.constant 0 : i32
    %c0_i32_0 = arith.constant 0 : i32
    %c0_i32_1 = arith.constant 0 : i32
    return %c0_i32, %c0_i32_0 : i32, i32
  }
  func.func @transform_8(%arg0: i32) -> (i32, i32) {
    %c0_i32 = arith.constant 0 : i32
    %c0_i32_0 = arith.constant 0 : i32
    %c0_i32_1 = arith.constant 0 : i32
    return %c0_i32, %c0_i32_0 : i32, i32
  }
  func.func @transform_9(%arg0: i32) -> (i32, i32) {
    %c0_i32 = arith.constant 0 : i32
    %c0_i32_0 = arith.constant 0 : i32
    %c0_i32_1 = arith.constant 0 : i32
    return %c0_i32, %c0_i32_0 : i32, i32
  }
  func.func @transform_10(%arg0: i32) -> (i32, i32) {
    %c0_i32 = arith.constant 0 : i32
    %c0_i32_0 = arith.constant 0 : i32
    %c0_i32_1 = arith.constant 0 : i32
    return %c0_i32, %c0_i32_0 : i32, i32
  }
  func.func @transform_11(%arg0: i32) -> (i32, i32, i32) {
    %c0_i32 = arith.constant 0 : i32
    %c0_i32_0 = arith.constant 0 : i32
    %c0_i32_1 = arith.constant 0 : i32
    return %arg0, %c0_i32, %c0_i32_0 : i32, i32, i32
  }
}

</mosaic_0001>

<llo_original>
// kernel: tpu_custom_call.1
$region0: #{tpu_custom_call.1}
  #allocation0 [shape = 'u32[]', space=smem, size = 0x4, offset = 0x4, fixed_abs, tag = 'smem constant byte address 0x4 - core index']
  #allocation1 [shape = 'u32[144,128]{1,0:T(1,128)}', space=vmem, size = 0x12000, scoped, tag = 'internal scratch']
  %s0 = inlined_call_operand.hbm [shape: f32[2,8,32], index: 0, kind: input, shape index: {}]
  %s1 = inlined_call_operand.vmem [shape: f32[32,8], index: 1, kind: input, shape index: {}]
  %s2 = inlined_call_operand.vmem [shape: f32[32,8], index: 2, kind: input, shape index: {}]
  %s3 = inlined_call_operand.vmem [shape: f32[32,64], index: 3, kind: input, shape index: {}]
  %s4 = inlined_call_operand.vmem [shape: f32[1,32], index: 4, kind: input, shape index: {}]
  %s5 = inlined_call_operand.vmem [shape: f32[32,32], index: 5, kind: input, shape index: {}]
  %s6 = inlined_call_operand.vmem [shape: f32[1,32], index: 6, kind: input, shape index: {}]
  %s7 = inlined_call_operand.vmem [shape: f32[32,64], index: 7, kind: input, shape index: {}]
  %s8 = inlined_call_operand.vmem [shape: f32[1,64], index: 8, kind: input, shape index: {}]
  %s9 = inlined_call_operand.hbm [shape: f32[32,32], index: 9, kind: input, shape index: {}]
  %s10 = inlined_call_operand.vmem [shape: f32[1,32], index: 10, kind: input, shape index: {}]
  %s11 = inlined_call_operand.hbm [shape: f32[2,8,32], index: 11, kind: output, shape index: {}]
  %s12 = sld [smem:[#allocation0]]
  $region85: #{tpu_custom_call.1} parent=0
    _
  %s14 = ssub.s32 1, %s12
  %s15 = scalar_select 0, %s14, %s12
  $region1: #{tpu_custom_call.1} parent=0
    #allocation2 [shape = 'u8[8192]{0}', space=vmem, size = 0x2000, scoped, tag = 'input window, operand 0']
    #allocation3 [shape = 's32[2]{0}', space=sflag, size = 0x8, scoped, tag = 'scoped memory for tpu_custom_call.1']
    #allocation4 [shape = 's32[2]{0}', space=sflag, size = 0x8, scoped, tag = 'scoped memory for tpu_custom_call.1']
    #allocation5 [shape = 'u8[16384]{0}', space=vmem, size = 0x4000, scoped, tag = 'input window, operand 9, single buffered']
    #allocation6 [shape = 's32[1]{0}', space=sflag, size = 0x4, scoped, tag = 'scoped memory for tpu_custom_call.1']
    #allocation7 [shape = 'u8[8192]{0}', space=vmem, size = 0x2000, scoped, tag = 'output window, operand 0']
    %16 = vsyncpa [#allocation3], 0
    %s17 = scalar_lea.sflag [#allocation3], 1
    %18 = vsyncpa %s17, 0
    %19 = vsyncpa [#allocation6], 0
    %20 = vsyncpa [#allocation4], 0
    %s21 = scalar_lea.sflag [#allocation4], 1
    %22 = vsyncpa %s21, 0
    loop: start=0, step=1, limit=4
    $region2: #{tpu_custom_call.1} parent=1 // loop_pre_header
      _
    $region3: #{tpu_custom_call.1} parent=1 // loop_header
      %s24 = sphi 0, %s28
      %p25 = scmp.ge.s32.totalorder %s24, 4
      %s34 = sphi 0, %s36
      %s37 = sphi 0, %s34
      %s38 = sphi 0, %s37
      %s54 = sphi 0, %s38
      %s58 = sphi 0, %s58
      %s60 = sphi 0, %s58
      %s61 = sphi 0, %s60
      %s75 = sphi 0, %s61
      %s79 = sphi 0, %s79
      %s81 = sphi 0, %s79
      %s82 = sphi 0, %s81
      %s96 = sphi 0, %s82
      %s100 = sphi 0, %s100
      %s102 = sphi 0, %s100
      %s103 = sphi 0, %s102
      %s117 = sphi 0, %s103
      %s121 = sphi 0, %s121
      %s123 = sphi 0, %s121
      %s124 = sphi 0, %s123
      %s138 = sphi 0, %s124
      %s142 = sphi 0, %s142
      %s144 = sphi 0, %s142
      %s145 = sphi 0, %s144
      %s159 = sphi 0, %s145
      %s163 = sphi 0, %s163
      %s165 = sphi 0, %s163
      %s166 = sphi 0, %s165
      %s180 = sphi 0, %s166
      %s184 = sphi 0, %s184
      %s186 = sphi 0, %s184
      %s187 = sphi 0, %s186
      %s201 = sphi 0, %s187
      %s205 = sphi 0, %s205
      %s207 = sphi 0, %s205
      %s208 = sphi 0, %s207
      %s222 = sphi 0, %s208
      %s226 = sphi 0, %s226
      %s228 = sphi 0, %s226
      %s229 = sphi 0, %s228
      %s243 = sphi 0, %s229
      %s247 = sphi 0, %s247
      %s249 = sphi 0, %s247
      %s250 = sphi 0, %s249
      %s264 = sphi 0, %s250
      %s270 = sphi 0, %s272
      %s273 = sphi 0, %s270
      %s274 = sphi 0, %s273
      %s290 = sphi 0, %s274
    $region4: #{tpu_custom_call.1} parent=1 // loop_header_branch
      %27 = sbr.rel (%p25) target = $region8
    $region5: #{tpu_custom_call.1} parent=1 // loop_body
      %s29 = ssub.s32 %s24, 1
      %s30 = ssub.s32 %s24, 2
      %s31 = sadd.s32 %s24, 1
      %s32 = ssub.s32 %s24, %s31
      %p33 = scmp.eq.s32.totalorder %s32, 0
      %s35 = sadd.s32 %s34, 1
      %s36 = scalar_select %p33, %s34, %s35
      %p39 = pneg %p33
      %p40 = scmp.eq.s32.totalorder %s24, 1
      %p41 = por %p39, %p40
      %p42 = scmp.ne.s32.totalorder %s34, %s37
      %p43 = scmp.eq.s32.totalorder %s24, 0
      %p44 = por %p42, %p43
      %p45 = scmp.ne.s32.totalorder %s34, %s37
      %p46 = scmp.eq.s32.totalorder %s29, 1
      %p47 = por %p45, %p46
      %p48 = scmp.ne.s32.totalorder %s37, %s38
      %p49 = scmp.eq.s32.totalorder %s29, 0
      %p50 = por %p48, %p49
      %p51 = scmp.ne.s32.totalorder %s37, %s38
      %p52 = scmp.eq.s32.totalorder %s30, 1
      %p53 = por %p51, %p52
      %p55 = scmp.ne.s32.totalorder %s38, %s54
      %p56 = scmp.eq.s32.totalorder %s30, 0
      %p57 = por %p55, %p56
      %s59 = sadd.s32 %s58, 1
      %p62 = scmp.eq.s32.totalorder %s24, 1
      %p63 = scmp.ne.s32.totalorder %s58, %s60
      %p64 = scmp.eq.s32.totalorder %s24, 0
      %p65 = por %p63, %p64
      %p66 = scmp.ne.s32.totalorder %s58, %s60
      %p67 = scmp.eq.s32.totalorder %s29, 1
      %p68 = por %p66, %p67
      %p69 = scmp.ne.s32.totalorder %s60, %s61
      %p70 = scmp.eq.s32.totalorder %s29, 0
      %p71 = por %p69, %p70
      %p72 = scmp.ne.s32.totalorder %s60, %s61
      %p73 = scmp.eq.s32.totalorder %s30, 1
      %p74 = por %p72, %p73
      %p76 = scmp.ne.s32.totalorder %s61, %s75
      %p77 = scmp.eq.s32.totalorder %s30, 0
      %p78 = por %p76, %p77
      %s80 = sadd.s32 %s79, 1
      %p83 = scmp.eq.s32.totalorder %s24, 1
      %p84 = scmp.ne.s32.totalorder %s79, %s81
      %p85 = scmp.eq.s32.totalorder %s24, 0
      %p86 = por %p84, %p85
      %p87 = scmp.ne.s32.totalorder %s79, %s81
      %p88 = scmp.eq.s32.totalorder %s29, 1
      %p89 = por %p87, %p88
      %p90 = scmp.ne.s32.totalorder %s81, %s82
      %p91 = scmp.eq.s32.totalorder %s29, 0
      %p92 = por %p90, %p91
      %p93 = scmp.ne.s32.totalorder %s81, %s82
      %p94 = scmp.eq.s32.totalorder %s30, 1
      %p95 = por %p93, %p94
      %p97 = scmp.ne.s32.totalorder %s82, %s96
      %p98 = scmp.eq.s32.totalorder %s30, 0
      %p99 = por %p97, %p98
      %s101 = sadd.s32 %s100, 1
      %p104 = scmp.eq.s32.totalorder %s24, 1
      %p105 = scmp.ne.s32.totalorder %s100, %s102
      %p106 = scmp.eq.s32.totalorder %s24, 0
      %p107 = por %p105, %p106
      %p108 = scmp.ne.s32.totalorder %s100, %s102
      %p109 = scmp.eq.s32.totalorder %s29, 1
      %p110 = por %p108, %p109
      %p111 = scmp.ne.s32.totalorder %s102, %s103
      %p112 = scmp.eq.s32.totalorder %s29, 0
      %p113 = por %p111, %p112
      %p114 = scmp.ne.s32.totalorder %s102, %s103
      %p115 = scmp.eq.s32.totalorder %s30, 1
      %p116 = por %p114, %p115
      %p118 = scmp.ne.s32.totalorder %s103, %s117
      %p119 = scmp.eq.s32.totalorder %s30, 0
      %p120 = por %p118, %p119
      %s122 = sadd.s32 %s121, 1
      %p125 = scmp.eq.s32.totalorder %s24, 1
      %p126 = scmp.ne.s32.totalorder %s121, %s123
      %p127 = scmp.eq.s32.totalorder %s24, 0
      %p128 = por %p126, %p127
      %p129 = scmp.ne.s32.totalorder %s121, %s123
      %p130 = scmp.eq.s32.totalorder %s29, 1
      %p131 = por %p129, %p130
      %p132 = scmp.ne.s32.totalorder %s123, %s124
      %p133 = scmp.eq.s32.totalorder %s29, 0
      %p134 = por %p132, %p133
      %p135 = scmp.ne.s32.totalorder %s123, %s124
      %p136 = scmp.eq.s32.totalorder %s30, 1
      %p137 = por %p135, %p136
      %p139 = scmp.ne.s32.totalorder %s124, %s138
      %p140 = scmp.eq.s32.totalorder %s30, 0
      %p141 = por %p139, %p140
      %s143 = sadd.s32 %s142, 1
      %p146 = scmp.eq.s32.totalorder %s24, 1
      %p147 = scmp.ne.s32.totalorder %s142, %s144
      %p148 = scmp.eq.s32.totalorder %s24, 0
      %p149 = por %p147, %p148
      %p150 = scmp.ne.s32.totalorder %s142, %s144
      %p151 = scmp.eq.s32.totalorder %s29, 1
      %p152 = por %p150, %p151
      %p153 = scmp.ne.s32.totalorder %s144, %s145
      %p154 = scmp.eq.s32.totalorder %s29, 0
      %p155 = por %p153, %p154
      %p156 = scmp.ne.s32.totalorder %s144, %s145
      %p157 = scmp.eq.s32.totalorder %s30, 1
      %p158 = por %p156, %p157
      %p160 = scmp.ne.s32.totalorder %s145, %s159
      %p161 = scmp.eq.s32.totalorder %s30, 0
      %p162 = por %p160, %p161
      %s164 = sadd.s32 %s163, 1
      %p167 = scmp.eq.s32.totalorder %s24, 1
      %p168 = scmp.ne.s32.totalorder %s163, %s165
      %p169 = scmp.eq.s32.totalorder %s24, 0
      %p170 = por %p168, %p169
      %p171 = scmp.ne.s32.totalorder %s163, %s165
      %p172 = scmp.eq.s32.totalorder %s29, 1
      %p173 = por %p171, %p172
      %p174 = scmp.ne.s32.totalorder %s165, %s166
      %p175 = scmp.eq.s32.totalorder %s29, 0
      %p176 = por %p174, %p175
      %p177 = scmp.ne.s32.totalorder %s165, %s166
      %p178 = scmp.eq.s32.totalorder %s30, 1
      %p179 = por %p177, %p178
      %p181 = scmp.ne.s32.totalorder %s166, %s180
      %p182 = scmp.eq.s32.totalorder %s30, 0
      %p183 = por %p181, %p182
      %s185 = sadd.s32 %s184, 1
      %p188 = scmp.eq.s32.totalorder %s24, 1
      %p189 = scmp.ne.s32.totalorder %s184, %s186
      %p190 = scmp.eq.s32.totalorder %s24, 0
      %p191 = por %p189, %p190
      %p192 = scmp.ne.s32.totalorder %s184, %s186
      %p193 = scmp.eq.s32.totalorder %s29, 1
      %p194 = por %p192, %p193
      %p195 = scmp.ne.s32.totalorder %s186, %s187
      %p196 = scmp.eq.s32.totalorder %s29, 0
      %p197 = por %p195, %p196
      %p198 = scmp.ne.s32.totalorder %s186, %s187
      %p199 = scmp.eq.s32.totalorder %s30, 1
      %p200 = por %p198, %p199
      %p202 = scmp.ne.s32.totalorder %s187, %s201
      %p203 = scmp.eq.s32.totalorder %s30, 0
      %p204 = por %p202, %p203
      %s206 = sadd.s32 %s205, 1
      %p209 = scmp.eq.s32.totalorder %s24, 1
      %p210 = scmp.ne.s32.totalorder %s205, %s207
      %p211 = scmp.eq.s32.totalorder %s24, 0
      %p212 = por %p210, %p211
      %p213 = scmp.ne.s32.totalorder %s205, %s207
      %p214 = scmp.eq.s32.totalorder %s29, 1
      %p215 = por %p213, %p214
      %p216 = scmp.ne.s32.totalorder %s207, %s208
      %p217 = scmp.eq.s32.totalorder %s29, 0
      %p218 = por %p216, %p217
      %p219 = scmp.ne.s32.totalorder %s207, %s208
      %p220 = scmp.eq.s32.totalorder %s30, 1
      %p221 = por %p219, %p220
      %p223 = scmp.ne.s32.totalorder %s208, %s222
      %p224 = scmp.eq.s32.totalorder %s30, 0
      %p225 = por %p223, %p224
      %s227 = sadd.s32 %s226, 1
      %p230 = scmp.eq.s32.totalorder %s24, 1
      %p231 = scmp.ne.s32.totalorder %s226, %s228
      %p232 = scmp.eq.s32.totalorder %s24, 0
      %p233 = por %p231, %p232
      %p234 = scmp.ne.s32.totalorder %s226, %s228
      %p235 = scmp.eq.s32.totalorder %s29, 1
      %p236 = por %p234, %p235
      %p237 = scmp.ne.s32.totalorder %s228, %s229
      %p238 = scmp.eq.s32.totalorder %s29, 0
      %p239 = por %p237, %p238
      %p240 = scmp.ne.s32.totalorder %s228, %s229
      %p241 = scmp.eq.s32.totalorder %s30, 1
      %p242 = por %p240, %p241
      %p244 = scmp.ne.s32.totalorder %s229, %s243
      %p245 = scmp.eq.s32.totalorder %s30, 0
      %p246 = por %p244, %p245
      %s248 = sadd.s32 %s247, 1
      %p251 = scmp.eq.s32.totalorder %s24, 1
      %p252 = scmp.ne.s32.totalorder %s247, %s249
      %p253 = scmp.eq.s32.totalorder %s24, 0
      %p254 = por %p252, %p253
      %p255 = scmp.ne.s32.totalorder %s247, %s249
      %p256 = scmp.eq.s32.totalorder %s29, 1
      %p257 = por %p255, %p256
      %p258 = scmp.ne.s32.totalorder %s249, %s250
      %p259 = scmp.eq.s32.totalorder %s29, 0
      %p260 = por %p258, %p259
      %p261 = scmp.ne.s32.totalorder %s249, %s250
      %p262 = scmp.eq.s32.totalorder %s30, 1
      %p263 = por %p261, %p262
      %p265 = scmp.ne.s32.totalorder %s250, %s264
      %p266 = scmp.eq.s32.totalorder %s30, 0
      %p267 = por %p265, %p266
      %s268 = ssub.s32 %s24, %s31
      %p269 = scmp.eq.s32.totalorder %s268, 0
      %s271 = sadd.s32 %s270, 1
      %s272 = scalar_select %p269, %s270, %s271
      %p275 = pneg %p269
      %p276 = scmp.eq.s32.totalorder %s24, 1
      %p277 = por %p275, %p276
      %p278 = scmp.ne.s32.totalorder %s270, %s273
      %p279 = scmp.eq.s32.totalorder %s24, 0
      %p280 = por %p278, %p279
      %p281 = scmp.ne.s32.totalorder %s270, %s273
      %p282 = scmp.eq.s32.totalorder %s29, 1
      %p283 = por %p281, %p282
      %p284 = scmp.ne.s32.totalorder %s273, %s274
      %p285 = scmp.eq.s32.totalorder %s29, 0
      %p286 = por %p284, %p285
      %p287 = scmp.ne.s32.totalorder %s273, %s274
      %p288 = scmp.eq.s32.totalorder %s30, 1
      %p289 = por %p287, %p288
      %p291 = scmp.ne.s32.totalorder %s274, %s290
      %p292 = scmp.eq.s32.totalorder %s30, 0
      %p293 = por %p291, %p292
      %p294 = scmp.le.s32.totalorder 1, %s24
      %p295 = scmp.lt.s32.totalorder %s24, 3
      %p296 = pnand %p294, %p295
      %p297 = pneg %p296
      // Predicated region
      $region9: #{tpu_custom_call.1} parent=5 // pred_check
        _
      $region10: #{tpu_custom_call.1} parent=5 // pred_check_branch
        %299 = sbr.rel (%p296) target = $region12
      $region11: #{tpu_custom_call.1} parent=5 // pred_region
        %s300 = ssub.s32 %s24, 1
        // Predicated region
        $region13: #{tpu_custom_call.1} parent=11 // pred_check
          %p301 = pneg %p71
        $region14: #{tpu_custom_call.1} parent=11 // pred_check_branch
          %303 = sbr.rel (%p301) target = $region16
        $region15: #{tpu_custom_call.1} parent=11 // pred_region
          _
        $region16: #{tpu_custom_call.1} parent=11 // pred_fallthru
          _
        // Predicated region
        $region17: #{tpu_custom_call.1} parent=11 // pred_check
          %p304 = pneg %p92
        $region18: #{tpu_custom_call.1} parent=11 // pred_check_branch
          %306 = sbr.rel (%p304) target = $region20
        $region19: #{tpu_custom_call.1} parent=11 // pred_region
          _
        $region20: #{tpu_custom_call.1} parent=11 // pred_fallthru
          _
        // Predicated region
        $region21: #{tpu_custom_call.1} parent=11 // pred_check
          %p307 = pneg %p113
        $region22: #{tpu_custom_call.1} parent=11 // pred_check_branch
          %309 = sbr.rel (%p307) target = $region24
        $region23: #{tpu_custom_call.1} parent=11 // pred_region
          _
        $region24: #{tpu_custom_call.1} parent=11 // pred_fallthru
          _
        // Predicated region
        $region25: #{tpu_custom_call.1} parent=11 // pred_check
          %p310 = pneg %p134
        $region26: #{tpu_custom_call.1} parent=11 // pred_check_branch
          %312 = sbr.rel (%p310) target = $region28
        $region27: #{tpu_custom_call.1} parent=11 // pred_region
          _
        $region28: #{tpu_custom_call.1} parent=11 // pred_fallthru
          _
        // Predicated region
        $region29: #{tpu_custom_call.1} parent=11 // pred_check
          %p313 = pneg %p155
        $region30: #{tpu_custom_call.1} parent=11 // pred_check_branch
          %315 = sbr.rel (%p313) target = $region32
        $region31: #{tpu_custom_call.1} parent=11 // pred_region
          _
        $region32: #{tpu_custom_call.1} parent=11 // pred_fallthru
          _
        // Predicated region
        $region33: #{tpu_custom_call.1} parent=11 // pred_check
          %p316 = pneg %p176
        $region34: #{tpu_custom_call.1} parent=11 // pred_check_branch
          %318 = sbr.rel (%p316) target = $region36
        $region35: #{tpu_custom_call.1} parent=11 // pred_region
          _
        $region36: #{tpu_custom_call.1} parent=11 // pred_fallthru
          _
        // Predicated region
        $region37: #{tpu_custom_call.1} parent=11 // pred_check
          %p319 = pneg %p197
        $region38: #{tpu_custom_call.1} parent=11 // pred_check_branch
          %321 = sbr.rel (%p319) target = $region40
        $region39: #{tpu_custom_call.1} parent=11 // pred_region
          _
        $region40: #{tpu_custom_call.1} parent=11 // pred_fallthru
          _
        // Predicated region
        $region41: #{tpu_custom_call.1} parent=11 // pred_check
          %p322 = pneg %p218
        $region42: #{tpu_custom_call.1} parent=11 // pred_check_branch
          %324 = sbr.rel (%p322) target = $region44
        $region43: #{tpu_custom_call.1} parent=11 // pred_region
          _
        $region44: #{tpu_custom_call.1} parent=11 // pred_fallthru
          _
        // Predicated region
        $region45: #{tpu_custom_call.1} parent=11 // pred_check
          %p325 = pneg %p239
        $region46: #{tpu_custom_call.1} parent=11 // pred_check_branch
          %327 = sbr.rel (%p325) target = $region48
        $region47: #{tpu_custom_call.1} parent=11 // pred_region
          %s329 = ssub.s32 512, 512
          %330 = vsyncadd [#allocation6], %s329
          %s331 = sshll.u32 [#allocation5], 4
          %s332 = int_to_ptr.vmem [resolvable:$true] %s331
          %337 = dma.hbm_to_vmem [thread:$0]  %s9, 512, %s332, [#allocation6], 128, 128, 8
        $region48: #{tpu_custom_call.1} parent=11 // pred_fallthru
          _
        // Predicated region
        $region49: #{tpu_custom_call.1} parent=11 // pred_check
          %p338 = pneg %p260
        $region50: #{tpu_custom_call.1} parent=11 // pred_check_branch
          %340 = sbr.rel (%p338) target = $region52
        $region51: #{tpu_custom_call.1} parent=11 // pred_region
          _
        $region52: #{tpu_custom_call.1} parent=11 // pred_fallthru
          _
      $region12: #{tpu_custom_call.1} parent=5 // pred_fallthru
        _
      %p341 = scmp.lt.s32.totalorder %s24, 2
      // Predicated region
      $region53: #{tpu_custom_call.1} parent=5 // pred_check
        %p342 = pneg %p341
      $region54: #{tpu_custom_call.1} parent=5 // pred_check_branch
        %344 = sbr.rel (%p342) target = $region56
      $region55: #{tpu_custom_call.1} parent=5 // pred_region
        // Predicated region
        $region57: #{tpu_custom_call.1} parent=55 // pred_check
          %p345 = pneg %p44
        $region58: #{tpu_custom_call.1} parent=55 // pred_check_branch
          %347 = sbr.rel (%p345) target = $region60
        $region59: #{tpu_custom_call.1} parent=55 // pred_region
          %s348 = sand.u32 %s34, 1
          %s349 = scalar_lea.sflag [#allocation3], %s348
          %s350 = sand.u32 %s34, 1
          %s351 = smul.addr %s350, 8
          %s352 = scalar_lea.vmem [#allocation2], %s351
          %s354 = ssub.s32 128, 128
          %355 = vsyncadd %s349, %s354
          %s356 = smul.addr %s24, 128
          %s357 = scalar_lea.hbm %s0, %s356
          %s359 = sshll.u32 %s352, 4
          %s360 = int_to_ptr.vmem [resolvable:$true] %s359
          %362 = dma.hbm_to_vmem [thread:$0]  %s357, 128, %s360, %s349
        $region60: #{tpu_custom_call.1} parent=55 // pred_fallthru
          _
      $region56: #{tpu_custom_call.1} parent=5 // pred_fallthru
        _
      %p363 = scmp.le.s32.totalorder 1, %s24
      %p364 = scmp.lt.s32.totalorder %s24, 3
      %p365 = pnand %p363, %p364
      %p366 = pneg %p365
      // Predicated region
      $region61: #{tpu_custom_call.1} parent=5 // pred_check
        _
      $region62: #{tpu_custom_call.1} parent=5 // pred_check_branch
        %368 = sbr.rel (%p365) target = $region64
      $region63: #{tpu_custom_call.1} parent=5 // pred_region
        %s369 = ssub.s32 %s24, 1
        %s370 = sand.u32 %s37, 1
        %s371 = scalar_lea.sflag [#allocation3], %s370
        %s372 = sand.u32 %s37, 1
        %s373 = smul.addr %s372, 8
        %s374 = scalar_lea.vmem [#allocation2], %s373
        // Predicated region
        $region65: #{tpu_custom_call.1} parent=63 // pred_check
          %p375 = pneg %p50
        $region66: #{tpu_custom_call.1} parent=63 // pred_check_branch
          %377 = sbr.rel (%p375) target = $region68
        $region67: #{tpu_custom_call.1} parent=63 // pred_region
          %378 = dma.done %s371, 128
        $region68: #{tpu_custom_call.1} parent=63 // pred_fallthru
          _
        // Predicated region
        $region69: #{tpu_custom_call.1} parent=63 // pred_check
          %p379 = pneg %p239
        $region70: #{tpu_custom_call.1} parent=63 // pred_check_branch
          %381 = sbr.rel (%p379) target = $region72
        $region71: #{tpu_custom_call.1} parent=63 // pred_region
          %382 = dma.done [#allocation6], 512
        $region72: #{tpu_custom_call.1} parent=63 // pred_fallthru
          _
        %s383 = sand.u32 %s37, 1
        %s384 = scalar_lea.sflag [#allocation3], %s383
        %s385 = sand.u32 %s37, 1
        %s386 = smul.addr %s385, 8
        %s387 = scalar_lea.vmem [#allocation2], %s386
        %p388 = pneg %p50
        %p389 = pneg %p47
        %p390 = pneg %p71
        %p391 = pneg %p68
        %p392 = pneg %p92
        %p393 = pneg %p89
        %p394 = pneg %p113
        %p395 = pneg %p110
        %p396 = pneg %p134
        %p397 = pneg %p131
        %p398 = pneg %p155
        %p399 = pneg %p152
        %p400 = pneg %p176
        %p401 = pneg %p173
        %p402 = pneg %p197
        %p403 = pneg %p194
        %p404 = pneg %p218
        %p405 = pneg %p215
        %p406 = pneg %p239
        %p407 = pneg %p236
        %p408 = pneg %p260
        %p409 = pneg %p257
        %p410 = pneg %p286
        %p411 = pneg %p283
        %s412 = sand.u32 %s273, 1
        %s413 = scalar_lea.sflag [#allocation4], %s412
        %s414 = sand.u32 %s273, 1
        %s415 = smul.addr %s414, 8
        %s416 = scalar_lea.vmem [#allocation7], %s415
        %v417 = vld [vmem:[%s374] sm:$0xff]
        %v418 = vld [vmem:[%s3] sm:$0xff]
        %v419 = vld [vmem:[%s3 + $0x8] sm:$0xff]
        %v420 = vld [vmem:[%s3 + $0x10] sm:$0xff]
        %v421 = vld [vmem:[%s3 + $0x18] sm:$0xff]
        %vm422 = vcmask 261120
        %v424 = vsel %vm422, %v417, 0
        %426 = vmatprep.subr.mxu0 0.0
        %427 = vmatpush1.msra.mxu0 %v418
        %428 = vmatprep.subr.mxu0 0.0
        %429 = vmatpush1.msra.mxu0 %v419
        %430 = vmatprep.subr.mxu0 0.0
        %431 = vmatpush1.msra.mxu0 %v420
        %432 = vmatprep.subr.mxu0 0.0
        %433 = vmatpush1.msra.mxu0 %v421
        %434 = vmatprep.subr.mxu0 0.0
        %435 = vmatpush1.msra.mxu0 0.0
        %436 = vmatprep.subr.mxu0 0.0
        %437 = vmatpush1.msra.mxu0 0.0
        %438 = vmatprep.subr.mxu0 0.0
        %439 = vmatpush1.msra.mxu0 0.0
        %440 = vmatprep.subr.mxu0 0.0
        %441 = vmatpush1.msra.mxu0 0.0
        %442 = vmatprep.subr.mxu0 0.0
        %443 = vmatpush1.msra.mxu0 0.0
        %444 = vmatprep.subr.mxu0 0.0
        %445 = vmatpush1.msra.mxu0 0.0
        %446 = vmatprep.subr.mxu0 0.0
        %447 = vmatpush1.msra.mxu0 0.0
        %448 = vmatprep.subr.mxu0 0.0
        %449 = vmatpush1.msra.mxu0 0.0
        %450 = vmatprep.subr.mxu0 0.0
        %451 = vmatpush1.msra.mxu0 0.0
        %452 = vmatprep.subr.mxu0 0.0
        %453 = vmatpush1.msra.mxu0 0.0
        %454 = vmatprep.subr.mxu0 0.0
        %455 = vmatpush1.msra.mxu0 0.0
        %456 = vmatprep.subr.mxu0 0.0
        %457 = vmatpush1.msra.mxu0 0.0
        %458 = vmatprep.subr.mxu0 0.0
        %459 = vmatpush1.msra.mxu0 0.0
        %460 = vmatprep.subr.mxu0 0.0
        %461 = vmatpush1.msra.mxu0 0.0
        %462 = vmatprep.subr.mxu0 0.0
        %463 = vmatpush1.msra.mxu0 0.0
        %464 = vmatprep.subr.mxu0 0.0
        %465 = vmatpush1.msra.mxu0 0.0
        %466 = vmatprep.subr.mxu0 0.0
        %467 = vmatpush1.msra.mxu0 0.0
        %468 = vmatprep.subr.mxu0 0.0
        %469 = vmatpush1.msra.mxu0 0.0
        %470 = vmatprep.subr.mxu0 0.0
        %471 = vmatpush1.msra.mxu0 0.0
        %472 = vmatprep.subr.mxu0 0.0
        %473 = vmatpush1.msra.mxu0 0.0
        %474 = vmatprep.subr.mxu0 0.0
        %475 = vmatpush1.msra.mxu0 0.0
        %476 = vmatprep.subr.mxu0 0.0
        %477 = vmatpush1.msra.mxu0 0.0
        %478 = vmatprep.subr.mxu0 0.0
        %479 = vmatpush1.msra.mxu0 0.0
        %480 = vmatprep.subr.mxu0 0.0
        %481 = vmatpush1.msra.mxu0 0.0
        %482 = vmatprep.subr.mxu0 0.0
        %483 = vmatpush1.msra.mxu0 0.0
        %484 = vmatprep.subr.mxu0 0.0
        %485 = vmatpush1.msra.mxu0 0.0
        %486 = vmatprep.subr.mxu0 0.0
        %487 = vmatpush1.msra.mxu0 0.0
        %488 = vmatprep.subr.mxu0 0.0
        %489 = vmatpush1.msra.mxu0 0.0
        %490 = vmatprep.mubr.f32.mxu0 0.0
        %491 = vmatmul.mubr.f32.gmra.mrb[0].mxu0 %v424
        %v492 = vpop.f32.mrb[0].mxu0
        %v493 = vadd.f32 0.0, %v492
        %v494 = vpop.f32.mrb[0].mxu0
        %495 = vdwg.mxu0
        %v496 = vld [vmem:[%s1] sm:$0xff]
        %v497 = vld [vmem:[%s1 + $0x8] sm:$0xff]
        %v498 = vld [vmem:[%s1 + $0x10] sm:$0xff]
        %v499 = vld [vmem:[%s1 + $0x18] sm:$0xff]
        %v500 = vld [vmem:[%s2] sm:$0xff]
        %v501 = vld [vmem:[%s2 + $0x8] sm:$0xff]
        %v502 = vld [vmem:[%s2 + $0x10] sm:$0xff]
        %v503 = vld [vmem:[%s2 + $0x18] sm:$0xff]
        %505 = vrot.lane.b32.xlu0 %v493, 96
        %v506 = vpop.permute.xlu0 %505
        %vm508 = vcmask 64512
        %v510 = vsel %vm508, %v500, 0
        %v513 = vsel %vm508, %v501, 0
        %v516 = vsel %vm508, %v502, 0
        %v519 = vsel %vm508, %v503, 0
        %521 = vmatprep.subr.mxu0 0.0
        %522 = vmatpush1.msra.mxu0 %v506
        %523 = vmatprep.subr.mxu0 0.0
        %524 = vmatpush1.msra.mxu0 0.0
        %525 = vmatprep.subr.mxu0 0.0
        %526 = vmatpush1.msra.mxu0 0.0
        %527 = vmatprep.subr.mxu0 0.0
        %528 = vmatpush1.msra.mxu0 0.0
        %529 = vmatprep.subr.mxu0 0.0
        %530 = vmatpush1.msra.mxu0 0.0
        %531 = vmatprep.subr.mxu0 0.0
        %532 = vmatpush1.msra.mxu0 0.0
        %533 = vmatprep.subr.mxu0 0.0
        %534 = vmatpush1.msra.mxu0 0.0
        %535 = vmatprep.subr.mxu0 0.0
        %536 = vmatpush1.msra.mxu0 0.0
        %537 = vmatprep.subr.mxu0 0.0
        %538 = vmatpush1.msra.mxu0 0.0
        %539 = vmatprep.subr.mxu0 0.0
        %540 = vmatpush1.msra.mxu0 0.0
        %541 = vmatprep.subr.mxu0 0.0
        %542 = vmatpush1.msra.mxu0 0.0
        %543 = vmatprep.subr.mxu0 0.0
        %544 = vmatpush1.msra.mxu0 0.0
        %545 = vmatprep.subr.mxu0 0.0
        %546 = vmatpush1.msra.mxu0 0.0
        %547 = vmatprep.subr.mxu0 0.0
        %548 = vmatpush1.msra.mxu0 0.0
        %549 = vmatprep.subr.mxu0 0.0
        %550 = vmatpush1.msra.mxu0 0.0
        %551 = vmatprep.subr.mxu0 0.0
        %552 = vmatpush1.msra.mxu0 0.0
        %553 = vmatprep.subr.mxu0 0.0
        %554 = vmatpush1.msra.mxu0 0.0
        %555 = vmatprep.subr.mxu0 0.0
        %556 = vmatpush1.msra.mxu0 0.0
        %557 = vmatprep.subr.mxu0 0.0
        %558 = vmatpush1.msra.mxu0 0.0
        %559 = vmatprep.subr.mxu0 0.0
        %560 = vmatpush1.msra.mxu0 0.0
        %561 = vmatprep.subr.mxu0 0.0
        %562 = vmatpush1.msra.mxu0 0.0
        %563 = vmatprep.subr.mxu0 0.0
        %564 = vmatpush1.msra.mxu0 0.0
        %565 = vmatprep.subr.mxu0 0.0
        %566 = vmatpush1.msra.mxu0 0.0
        %567 = vmatprep.subr.mxu0 0.0
        %568 = vmatpush1.msra.mxu0 0.0
        %569 = vmatprep.subr.mxu0 0.0
        %570 = vmatpush1.msra.mxu0 0.0
        %571 = vmatprep.subr.mxu0 0.0
        %572 = vmatpush1.msra.mxu0 0.0
        %573 = vmatprep.subr.mxu0 0.0
        %574 = vmatpush1.msra.mxu0 0.0
        %575 = vmatprep.subr.mxu0 0.0
        %576 = vmatpush1.msra.mxu0 0.0
        %577 = vmatprep.subr.mxu0 0.0
        %578 = vmatpush1.msra.mxu0 0.0
        %579 = vmatprep.subr.mxu0 0.0
        %580 = vmatpush1.msra.mxu0 0.0
        %581 = vmatprep.subr.mxu0 0.0
        %582 = vmatpush1.msra.mxu0 0.0
        %583 = vmatprep.subr.mxu0 0.0
        %584 = vmatpush1.msra.mxu0 0.0
        %585 = vmatprep.mubr.f32.mxu0 0.0
        %586 = vmatmul.mubr.f32.gmra.mrb[0].mxu0 %v510
        %v587 = vpop.f32.mrb[0].mxu0
        %v588 = vadd.f32 0.0, %v587
        %v589 = vpop.f32.mrb[0].mxu0
        %590 = vmatprep.mubr.f32.mxu0 0.0
        %591 = vmatmul.mubr.f32.gmra.mrb[0].mxu0 %v513
        %v592 = vpop.f32.mrb[0].mxu0
        %v593 = vadd.f32 0.0, %v592
        %v594 = vpop.f32.mrb[0].mxu0
        %595 = vmatprep.mubr.f32.mxu0 0.0
        %596 = vmatmul.mubr.f32.gmra.mrb[0].mxu0 %v516
        %v597 = vpop.f32.mrb[0].mxu0
        %v598 = vadd.f32 0.0, %v597
        %v599 = vpop.f32.mrb[0].mxu0
        %600 = vmatprep.mubr.f32.mxu0 0.0
        %601 = vmatmul.mubr.f32.gmra.mrb[0].mxu0 %v519
        %v602 = vpop.f32.mrb[0].mxu0
        %v603 = vadd.f32 0.0, %v602
        %v604 = vpop.f32.mrb[0].mxu0
        %605 = vdwg.mxu0
        %v607 = vsel %vm508, %v496, 0
        %v610 = vsel %vm508, %v497, 0
        %v613 = vsel %vm508, %v498, 0
        %v616 = vsel %vm508, %v499, 0
        %618 = vmatprep.subr.mxu0 0.0
        %619 = vmatpush1.msra.mxu0 %v493
        %620 = vmatprep.subr.mxu0 0.0
        %621 = vmatpush1.msra.mxu0 0.0
        %622 = vmatprep.subr.mxu0 0.0
        %623 = vmatpush1.msra.mxu0 0.0
        %624 = vmatprep.subr.mxu0 0.0
        %625 = vmatpush1.msra.mxu0 0.0
        %626 = vmatprep.subr.mxu0 0.0
        %627 = vmatpush1.msra.mxu0 0.0
        %628 = vmatprep.subr.mxu0 0.0
        %629 = vmatpush1.msra.mxu0 0.0
        %630 = vmatprep.subr.mxu0 0.0
        %631 = vmatpush1.msra.mxu0 0.0
        %632 = vmatprep.subr.mxu0 0.0
        %633 = vmatpush1.msra.mxu0 0.0
        %634 = vmatprep.subr.mxu0 0.0
        %635 = vmatpush1.msra.mxu0 0.0
        %636 = vmatprep.subr.mxu0 0.0
        %637 = vmatpush1.msra.mxu0 0.0
        %638 = vmatprep.subr.mxu0 0.0
        %639 = vmatpush1.msra.mxu0 0.0
        %640 = vmatprep.subr.mxu0 0.0
        %641 = vmatpush1.msra.mxu0 0.0
        %642 = vmatprep.subr.mxu0 0.0
        %643 = vmatpush1.msra.mxu0 0.0
        %644 = vmatprep.subr.mxu0 0.0
        %645 = vmatpush1.msra.mxu0 0.0
        %646 = vmatprep.subr.mxu0 0.0
        %647 = vmatpush1.msra.mxu0 0.0
        %648 = vmatprep.subr.mxu0 0.0
        %649 = vmatpush1.msra.mxu0 0.0
        %650 = vmatprep.subr.mxu0 0.0
        %651 = vmatpush1.msra.mxu0 0.0
        %652 = vmatprep.subr.mxu0 0.0
        %653 = vmatpush1.msra.mxu0 0.0
        %654 = vmatprep.subr.mxu0 0.0
        %655 = vmatpush1.msra.mxu0 0.0
        %656 = vmatprep.subr.mxu0 0.0
        %657 = vmatpush1.msra.mxu0 0.0
        %658 = vmatprep.subr.mxu0 0.0
        %659 = vmatpush1.msra.mxu0 0.0
        %660 = vmatprep.subr.mxu0 0.0
        %661 = vmatpush1.msra.mxu0 0.0
        %662 = vmatprep.subr.mxu0 0.0
        %663 = vmatpush1.msra.mxu0 0.0
        %664 = vmatprep.subr.mxu0 0.0
        %665 = vmatpush1.msra.mxu0 0.0
        %666 = vmatprep.subr.mxu0 0.0
        %667 = vmatpush1.msra.mxu0 0.0
        %668 = vmatprep.subr.mxu0 0.0
        %669 = vmatpush1.msra.mxu0 0.0
        %670 = vmatprep.subr.mxu0 0.0
        %671 = vmatpush1.msra.mxu0 0.0
        %672 = vmatprep.subr.mxu0 0.0
        %673 = vmatpush1.msra.mxu0 0.0
        %674 = vmatprep.subr.mxu0 0.0
        %675 = vmatpush1.msra.mxu0 0.0
        %676 = vmatprep.subr.mxu0 0.0
        %677 = vmatpush1.msra.mxu0 0.0
        %678 = vmatprep.subr.mxu0 0.0
        %679 = vmatpush1.msra.mxu0 0.0
        %680 = vmatprep.subr.mxu0 0.0
        %681 = vmatpush1.msra.mxu0 0.0
        %682 = vmatprep.mubr.f32.mxu0 0.0
        %683 = vmatmul.mubr.f32.gmra.mrb[0].mxu0 %v607
        %v684 = vpop.f32.mrb[0].mxu0
        %v685 = vadd.f32 %v588, %v684
        %v686 = vpop.f32.mrb[0].mxu0
        %687 = vmatprep.mubr.f32.mxu0 0.0
        %688 = vmatmul.mubr.f32.gmra.mrb[0].mxu0 %v610
        %v689 = vpop.f32.mrb[0].mxu0
        %v690 = vadd.f32 %v593, %v689
        %v691 = vpop.f32.mrb[0].mxu0
        %692 = vmatprep.mubr.f32.mxu0 0.0
        %693 = vmatmul.mubr.f32.gmra.mrb[0].mxu0 %v613
        %v694 = vpop.f32.mrb[0].mxu0
        %v695 = vadd.f32 %v598, %v694
        %v696 = vpop.f32.mrb[0].mxu0
        %697 = vmatprep.mubr.f32.mxu0 0.0
        %698 = vmatmul.mubr.f32.gmra.mrb[0].mxu0 %v616
        %v699 = vpop.f32.mrb[0].mxu0
        %v700 = vadd.f32 %v603, %v699
        %v701 = vpop.f32.mrb[0].mxu0
        %702 = vdwg.mxu0
        %v703 = vld [vmem:[%s4] sm:$0x1]
        %v705 = vlaneseq
        %v706 = vshrl.u32 %v705, 7
        %v707 = vsub.s32 0, %v706
        %v708 = vrot.slane %v703, %v707
        %v710 = vadd.f32 %v685, %v708
        %v711 = vadd.f32 %v690, %v708
        %v712 = vadd.f32 %v695, %v708
        %v713 = vadd.f32 %v700, %v708
        %v714 = vmax.f32 %v710, 0.0
        %v715 = vmax.f32 %v711, 0.0
        %v716 = vmax.f32 %v712, 0.0
        %v717 = vmax.f32 %v713, 0.0
        %v718 = vld [vmem:[%s5] sm:$0xff]
        %v719 = vld [vmem:[%s5 + $0x8] sm:$0xff]
        %v720 = vld [vmem:[%s5 + $0x10] sm:$0xff]
        %v721 = vld [vmem:[%s5 + $0x18] sm:$0xff]
        %v722 = vld [vmem:[%s6] sm:$0x1]
        %v724 = vlaneseq
        %v725 = vshrl.u32 %v724, 7
        %v726 = vsub.s32 0, %v725
        %v727 = vrot.slane %v722, %v726
        %729 = vmatprep.subr.mxu0 0.0
        %730 = vmatpush1.msra.mxu0 %v718
        %731 = vmatprep.subr.mxu0 0.0
        %732 = vmatpush1.msra.mxu0 %v719
        %733 = vmatprep.subr.mxu0 0.0
        %734 = vmatpush1.msra.mxu0 %v720
        %735 = vmatprep.subr.mxu0 0.0
        %736 = vmatpush1.msra.mxu0 %v721
        %737 = vmatprep.subr.mxu0 0.0
        %738 = vmatpush1.msra.mxu0 0.0
        %739 = vmatprep.subr.mxu0 0.0
        %740 = vmatpush1.msra.mxu0 0.0
        %741 = vmatprep.subr.mxu0 0.0
        %742 = vmatpush1.msra.mxu0 0.0
        %743 = vmatprep.subr.mxu0 0.0
        %744 = vmatpush1.msra.mxu0 0.0
        %745 = vmatprep.subr.mxu0 0.0
        %746 = vmatpush1.msra.mxu0 0.0
        %747 = vmatprep.subr.mxu0 0.0
        %748 = vmatpush1.msra.mxu0 0.0
        %749 = vmatprep.subr.mxu0 0.0
        %750 = vmatpush1.msra.mxu0 0.0
        %751 = vmatprep.subr.mxu0 0.0
        %752 = vmatpush1.msra.mxu0 0.0
        %753 = vmatprep.subr.mxu0 0.0
        %754 = vmatpush1.msra.mxu0 0.0
        %755 = vmatprep.subr.mxu0 0.0
        %756 = vmatpush1.msra.mxu0 0.0
        %757 = vmatprep.subr.mxu0 0.0
        %758 = vmatpush1.msra.mxu0 0.0
        %759 = vmatprep.subr.mxu0 0.0
        %760 = vmatpush1.msra.mxu0 0.0
        %761 = vmatprep.subr.mxu0 0.0
        %762 = vmatpush1.msra.mxu0 0.0
        %763 = vmatprep.subr.mxu0 0.0
        %764 = vmatpush1.msra.mxu0 0.0
        %765 = vmatprep.subr.mxu0 0.0
        %766 = vmatpush1.msra.mxu0 0.0
        %767 = vmatprep.subr.mxu0 0.0
        %768 = vmatpush1.msra.mxu0 0.0
        %769 = vmatprep.subr.mxu0 0.0
        %770 = vmatpush1.msra.mxu0 0.0
        %771 = vmatprep.subr.mxu0 0.0
        %772 = vmatpush1.msra.mxu0 0.0
        %773 = vmatprep.subr.mxu0 0.0
        %774 = vmatpush1.msra.mxu0 0.0
        %775 = vmatprep.subr.mxu0 0.0
        %776 = vmatpush1.msra.mxu0 0.0
        %777 = vmatprep.subr.mxu0 0.0
        %778 = vmatpush1.msra.mxu0 0.0
        %779 = vmatprep.subr.mxu0 0.0
        %780 = vmatpush1.msra.mxu0 0.0
        %781 = vmatprep.subr.mxu0 0.0
        %782 = vmatpush1.msra.mxu0 0.0
        %783 = vmatprep.subr.mxu0 0.0
        %784 = vmatpush1.msra.mxu0 0.0
        %785 = vmatprep.subr.mxu0 0.0
        %786 = vmatpush1.msra.mxu0 0.0
        %787 = vmatprep.subr.mxu0 0.0
        %788 = vmatpush1.msra.mxu0 0.0
        %789 = vmatprep.subr.mxu0 0.0
        %790 = vmatpush1.msra.mxu0 0.0
        %791 = vmatprep.subr.mxu0 0.0
        %792 = vmatpush1.msra.mxu0 0.0
        %793 = vmatprep.mubr.f32.mxu0 0.0
        %794 = vmatmul.mubr.f32.gmra.mrb[0].mxu0 %v424
        %v795 = vpop.f32.mrb[0].mxu0
        %v796 = vadd.f32 %v727, %v795
        %v797 = vpop.f32.mrb[0].mxu0
        %798 = vdwg.mxu0
        %v799 = vmul.f32 %v796, 0.35355338
        %v800 = vld [vmem:[%s7] sm:$0xff]
        %v801 = vld [vmem:[%s7 + $0x8] sm:$0xff]
        %v802 = vld [vmem:[%s7 + $0x10] sm:$0xff]
        %v803 = vld [vmem:[%s7 + $0x18] sm:$0xff]
        %v804 = vld [vmem:[%s8] sm:$0x1]
        %v806 = vlaneseq
        %v807 = vshrl.u32 %v806, 7
        %v808 = vsub.s32 0, %v807
        %v809 = vrot.slane %v804, %v808
        %v812 = vsel %vm422, %v714, 0
        %v815 = vsel %vm422, %v715, 0
        %v818 = vsel %vm422, %v716, 0
        %v821 = vsel %vm422, %v717, 0
        %823 = vmatprep.subr.mxu0 0.0
        %824 = vmatpush1.msra.mxu0 %v800
        %825 = vmatprep.subr.mxu0 0.0
        %826 = vmatpush1.msra.mxu0 %v801
        %827 = vmatprep.subr.mxu0 0.0
        %828 = vmatpush1.msra.mxu0 %v802
        %829 = vmatprep.subr.mxu0 0.0
        %830 = vmatpush1.msra.mxu0 %v803
        %831 = vmatprep.subr.mxu0 0.0
        %832 = vmatpush1.msra.mxu0 0.0
        %833 = vmatprep.subr.mxu0 0.0
        %834 = vmatpush1.msra.mxu0 0.0
        %835 = vmatprep.subr.mxu0 0.0
        %836 = vmatpush1.msra.mxu0 0.0
        %837 = vmatprep.subr.mxu0 0.0
        %838 = vmatpush1.msra.mxu0 0.0
        %839 = vmatprep.subr.mxu0 0.0
        %840 = vmatpush1.msra.mxu0 0.0
        %841 = vmatprep.subr.mxu0 0.0
        %842 = vmatpush1.msra.mxu0 0.0
        %843 = vmatprep.subr.mxu0 0.0
        %844 = vmatpush1.msra.mxu0 0.0
        %845 = vmatprep.subr.mxu0 0.0
        %846 = vmatpush1.msra.mxu0 0.0
        %847 = vmatprep.subr.mxu0 0.0
        %848 = vmatpush1.msra.mxu0 0.0
        %849 = vmatprep.subr.mxu0 0.0
        %850 = vmatpush1.msra.mxu0 0.0
        %851 = vmatprep.subr.mxu0 0.0
        %852 = vmatpush1.msra.mxu0 0.0
        %853 = vmatprep.subr.mxu0 0.0
        %854 = vmatpush1.msra.mxu0 0.0
        %855 = vmatprep.subr.mxu0 0.0
        %856 = vmatpush1.msra.mxu0 0.0
        %857 = vmatprep.subr.mxu0 0.0
        %858 = vmatpush1.msra.mxu0 0.0
        %859 = vmatprep.subr.mxu0 0.0
        %860 = vmatpush1.msra.mxu0 0.0
        %861 = vmatprep.subr.mxu0 0.0
        %862 = vmatpush1.msra.mxu0 0.0
        %863 = vmatprep.subr.mxu0 0.0
        %864 = vmatpush1.msra.mxu0 0.0
        %865 = vmatprep.subr.mxu0 0.0
        %866 = vmatpush1.msra.mxu0 0.0
        %867 = vmatprep.subr.mxu0 0.0
        %868 = vmatpush1.msra.mxu0 0.0
        %869 = vmatprep.subr.mxu0 0.0
        %870 = vmatpush1.msra.mxu0 0.0
        %871 = vmatprep.subr.mxu0 0.0
        %872 = vmatpush1.msra.mxu0 0.0
        %873 = vmatprep.subr.mxu0 0.0
        %874 = vmatpush1.msra.mxu0 0.0
        %875 = vmatprep.subr.mxu0 0.0
        %876 = vmatpush1.msra.mxu0 0.0
        %877 = vmatprep.subr.mxu0 0.0
        %878 = vmatpush1.msra.mxu0 0.0
        %879 = vmatprep.subr.mxu0 0.0
        %880 = vmatpush1.msra.mxu0 0.0
        %881 = vmatprep.subr.mxu0 0.0
        %882 = vmatpush1.msra.mxu0 0.0
        %883 = vmatprep.subr.mxu0 0.0
        %884 = vmatpush1.msra.mxu0 0.0
        %885 = vmatprep.subr.mxu0 0.0
        %886 = vmatpush1.msra.mxu0 0.0
        %887 = vmatprep.mubr.f32.mxu0 0.0
        %888 = vmatmul.mubr.f32.gmra.mrb[0].mxu0 %v812
        %v889 = vpop.f32.mrb[0].mxu0
        %v890 = vadd.f32 %v809, %v889
        %v891 = vpop.f32.mrb[0].mxu0
        %892 = vmatprep.mubr.f32.mxu0 0.0
        %893 = vmatmul.mubr.f32.gmra.mrb[0].mxu0 %v815
        %v894 = vpop.f32.mrb[0].mxu0
        %v895 = vadd.f32 %v809, %v894
        %v896 = vpop.f32.mrb[0].mxu0
        %897 = vmatprep.mubr.f32.mxu0 0.0
        %898 = vmatmul.mubr.f32.gmra.mrb[0].mxu0 %v818
        %v899 = vpop.f32.mrb[0].mxu0
        %v900 = vadd.f32 %v809, %v899
        %v901 = vpop.f32.mrb[0].mxu0
        %902 = vmatprep.mubr.f32.mxu0 0.0
        %903 = vmatmul.mubr.f32.gmra.mrb[0].mxu0 %v821
        %v904 = vpop.f32.mrb[0].mxu0
        %v905 = vadd.f32 %v809, %v904
        %v906 = vpop.f32.mrb[0].mxu0
        %907 = vdwg.mxu0
        %909 = vrot.lane.b32.xlu0 %v799, 120
        %v910 = vpop.permute.xlu0 %909
        %911 = vrot.lane.b32.xlu0 %v799, 112
        %v912 = vpop.permute.xlu0 %911
        %913 = vrot.lane.b32.xlu0 %v799, 104
        %v914 = vpop.permute.xlu0 %913
        %919 = vrot.lane.b32.xlu0 %v890, 120
        %v920 = vpop.permute.xlu0 %919
        %921 = vrot.lane.b32.xlu0 %v895, 120
        %v922 = vpop.permute.xlu0 %921
        %923 = vrot.lane.b32.xlu0 %v900, 120
        %v924 = vpop.permute.xlu0 %923
        %925 = vrot.lane.b32.xlu0 %v905, 120
        %v926 = vpop.permute.xlu0 %925
        %927 = vrot.lane.b32.xlu0 %v890, 112
        %v928 = vpop.permute.xlu0 %927
        %929 = vrot.lane.b32.xlu0 %v895, 112
        %v930 = vpop.permute.xlu0 %929
        %931 = vrot.lane.b32.xlu0 %v900, 112
        %v932 = vpop.permute.xlu0 %931
        %933 = vrot.lane.b32.xlu0 %v905, 112
        %v934 = vpop.permute.xlu0 %933
        %935 = vrot.lane.b32.xlu0 %v890, 104
        %v936 = vpop.permute.xlu0 %935
        %937 = vrot.lane.b32.xlu0 %v895, 104
        %v938 = vpop.permute.xlu0 %937
        %939 = vrot.lane.b32.xlu0 %v900, 104
        %v940 = vpop.permute.xlu0 %939
        %941 = vrot.lane.b32.xlu0 %v905, 104
        %v942 = vpop.permute.xlu0 %941
        %v943 = vlaneseq
        %v944 = vand.u32 %v943, 127
        %vm945 = vcmp.lt.s32.totalorder %v944, 28
        %v946 = vsel %vm945, 0.0, -1e+30
        %v947 = vsel %vm508, %v799, 0
        %v949 = vsel %vm508, %v890, 0
        %v951 = vsel %vm508, %v895, 0
        %v953 = vsel %vm508, %v900, 0
        %v955 = vsel %vm508, %v905, 0
        %957 = vmatprep.subr.mxu0 0.0
        %958 = vmatpush1.xpose.msra.mxu0 %v949
        %959 = vmatprep.subr.mxu0 0.0
        %960 = vmatpush1.xpose.msra.mxu0 %v951
        %961 = vmatprep.subr.mxu0 0.0
        %962 = vmatpush1.xpose.msra.mxu0 %v953
        %963 = vmatprep.subr.mxu0 0.0
        %964 = vmatpush1.xpose.msra.mxu0 %v955
        %965 = vmatprep.subr.mxu0 0.0
        %966 = vmatpush1.xpose.msra.mxu0 0.0
        %967 = vmatprep.subr.mxu0 0.0
        %968 = vmatpush1.xpose.msra.mxu0 0.0
        %969 = vmatprep.subr.mxu0 0.0
        %970 = vmatpush1.xpose.msra.mxu0 0.0
        %971 = vmatprep.subr.mxu0 0.0
        %972 = vmatpush1.xpose.msra.mxu0 0.0
        %973 = vmatprep.subr.mxu0 0.0
        %974 = vmatpush1.xpose.msra.mxu0 0.0
        %975 = vmatprep.subr.mxu0 0.0
        %976 = vmatpush1.xpose.msra.mxu0 0.0
        %977 = vmatprep.subr.mxu0 0.0
        %978 = vmatpush1.xpose.msra.mxu0 0.0
        %979 = vmatprep.subr.mxu0 0.0
        %980 = vmatpush1.xpose.msra.mxu0 0.0
        %981 = vmatprep.subr.mxu0 0.0
        %982 = vmatpush1.xpose.msra.mxu0 0.0
        %983 = vmatprep.subr.mxu0 0.0
        %984 = vmatpush1.xpose.msra.mxu0 0.0
        %985 = vmatprep.subr.mxu0 0.0
        %986 = vmatpush1.xpose.msra.mxu0 0.0
        %987 = vmatprep.subr.mxu0 0.0
        %988 = vmatpush1.xpose.msra.mxu0 0.0
        %989 = vmatprep.subr.mxu0 0.0
        %990 = vmatpush1.xpose.msra.mxu0 0.0
        %991 = vmatprep.subr.mxu0 0.0
        %992 = vmatpush1.xpose.msra.mxu0 0.0
        %993 = vmatprep.subr.mxu0 0.0
        %994 = vmatpush1.xpose.msra.mxu0 0.0
        %995 = vmatprep.subr.mxu0 0.0
        %996 = vmatpush1.xpose.msra.mxu0 0.0
        %997 = vmatprep.subr.mxu0 0.0
        %998 = vmatpush1.xpose.msra.mxu0 0.0
        %999 = vmatprep.subr.mxu0 0.0
        %1000 = vmatpush1.xpose.msra.mxu0 0.0
        %1001 = vmatprep.subr.mxu0 0.0
        %1002 = vmatpush1.xpose.msra.mxu0 0.0
        %1003 = vmatprep.subr.mxu0 0.0
        %1004 = vmatpush1.xpose.msra.mxu0 0.0
        %1005 = vmatprep.subr.mxu0 0.0
        %1006 = vmatpush1.xpose.msra.mxu0 0.0
        %1007 = vmatprep.subr.mxu0 0.0
        %1008 = vmatpush1.xpose.msra.mxu0 0.0
        %1009 = vmatprep.subr.mxu0 0.0
        %1010 = vmatpush1.xpose.msra.mxu0 0.0
        %1011 = vmatprep.subr.mxu0 0.0
        %1012 = vmatpush1.xpose.msra.mxu0 0.0
        %1013 = vmatprep.subr.mxu0 0.0
        %1014 = vmatpush1.xpose.msra.mxu0 0.0
        %1015 = vmatprep.subr.mxu0 0.0
        %1016 = vmatpush1.xpose.msra.mxu0 0.0
        %1017 = vmatprep.subr.mxu0 0.0
        %1018 = vmatpush1.xpose.msra.mxu0 0.0
        %1019 = vmatprep.subr.mxu0 0.0
        %1020 = vmatpush1.xpose.msra.mxu0 0.0
        %1021 = vmatprep.mubr.f32.mxu0 0.0
        %1022 = vmatmul.mubr.f32.gmra.mrb[0].mxu0 %v947
        %v1023 = vpop.f32.mrb[0].mxu0
        %v1024 = vadd.f32 %v946, %v1023
        %v1025 = vpop.f32.mrb[0].mxu0
        %1026 = vdwg.mxu0
        %v1027 = vsel %vm508, %v910, 0
        %v1029 = vsel %vm508, %v920, 0
        %v1031 = vsel %vm508, %v922, 0
        %v1033 = vsel %vm508, %v924, 0
        %v1035 = vsel %vm508, %v926, 0
        %1037 = vmatprep.subr.mxu0 0.0
        %1038 = vmatpush1.xpose.msra.mxu0 %v1029
        %1039 = vmatprep.subr.mxu0 0.0
        %1040 = vmatpush1.xpose.msra.mxu0 %v1031
        %1041 = vmatprep.subr.mxu0 0.0
        %1042 = vmatpush1.xpose.msra.mxu0 %v1033
        %1043 = vmatprep.subr.mxu0 0.0
        %1044 = vmatpush1.xpose.msra.mxu0 %v1035
        %1045 = vmatprep.subr.mxu0 0.0
        %1046 = vmatpush1.xpose.msra.mxu0 0.0
        %1047 = vmatprep.subr.mxu0 0.0
        %1048 = vmatpush1.xpose.msra.mxu0 0.0
        %1049 = vmatprep.subr.mxu0 0.0
        %1050 = vmatpush1.xpose.msra.mxu0 0.0
        %1051 = vmatprep.subr.mxu0 0.0
        %1052 = vmatpush1.xpose.msra.mxu0 0.0
        %1053 = vmatprep.subr.mxu0 0.0
        %1054 = vmatpush1.xpose.msra.mxu0 0.0
        %1055 = vmatprep.subr.mxu0 0.0
        %1056 = vmatpush1.xpose.msra.mxu0 0.0
        %1057 = vmatprep.subr.mxu0 0.0
        %1058 = vmatpush1.xpose.msra.mxu0 0.0
        %1059 = vmatprep.subr.mxu0 0.0
        %1060 = vmatpush1.xpose.msra.mxu0 0.0
        %1061 = vmatprep.subr.mxu0 0.0
        %1062 = vmatpush1.xpose.msra.mxu0 0.0
        %1063 = vmatprep.subr.mxu0 0.0
        %1064 = vmatpush1.xpose.msra.mxu0 0.0
        %1065 = vmatprep.subr.mxu0 0.0
        %1066 = vmatpush1.xpose.msra.mxu0 0.0
        %1067 = vmatprep.subr.mxu0 0.0
        %1068 = vmatpush1.xpose.msra.mxu0 0.0
        %1069 = vmatprep.subr.mxu0 0.0
        %1070 = vmatpush1.xpose.msra.mxu0 0.0
        %1071 = vmatprep.subr.mxu0 0.0
        %1072 = vmatpush1.xpose.msra.mxu0 0.0
        %1073 = vmatprep.subr.mxu0 0.0
        %1074 = vmatpush1.xpose.msra.mxu0 0.0
        %1075 = vmatprep.subr.mxu0 0.0
        %1076 = vmatpush1.xpose.msra.mxu0 0.0
        %1077 = vmatprep.subr.mxu0 0.0
        %1078 = vmatpush1.xpose.msra.mxu0 0.0
        %1079 = vmatprep.subr.mxu0 0.0
        %1080 = vmatpush1.xpose.msra.mxu0 0.0
        %1081 = vmatprep.subr.mxu0 0.0
        %1082 = vmatpush1.xpose.msra.mxu0 0.0
        %1083 = vmatprep.subr.mxu0 0.0
        %1084 = vmatpush1.xpose.msra.mxu0 0.0
        %1085 = vmatprep.subr.mxu0 0.0
        %1086 = vmatpush1.xpose.msra.mxu0 0.0
        %1087 = vmatprep.subr.mxu0 0.0
        %1088 = vmatpush1.xpose.msra.mxu0 0.0
        %1089 = vmatprep.subr.mxu0 0.0
        %1090 = vmatpush1.xpose.msra.mxu0 0.0
        %1091 = vmatprep.subr.mxu0 0.0
        %1092 = vmatpush1.xpose.msra.mxu0 0.0
        %1093 = vmatprep.subr.mxu0 0.0
        %1094 = vmatpush1.xpose.msra.mxu0 0.0
        %1095 = vmatprep.subr.mxu0 0.0
        %1096 = vmatpush1.xpose.msra.mxu0 0.0
        %1097 = vmatprep.subr.mxu0 0.0
        %1098 = vmatpush1.xpose.msra.mxu0 0.0
        %1099 = vmatprep.subr.mxu0 0.0
        %1100 = vmatpush1.xpose.msra.mxu0 0.0
        %1101 = vmatprep.mubr.f32.mxu0 0.0
        %1102 = vmatmul.mubr.f32.gmra.mrb[0].mxu0 %v1027
        %v1103 = vpop.f32.mrb[0].mxu0
        %v1104 = vadd.f32 %v946, %v1103
        %v1105 = vpop.f32.mrb[0].mxu0
        %1106 = vdwg.mxu0
        %v1107 = vsel %vm508, %v912, 0
        %v1109 = vsel %vm508, %v928, 0
        %v1111 = vsel %vm508, %v930, 0
        %v1113 = vsel %vm508, %v932, 0
        %v1115 = vsel %vm508, %v934, 0
        %1117 = vmatprep.subr.mxu0 0.0
        %1118 = vmatpush1.xpose.msra.mxu0 %v1109
        %1119 = vmatprep.subr.mxu0 0.0
        %1120 = vmatpush1.xpose.msra.mxu0 %v1111
        %1121 = vmatprep.subr.mxu0 0.0
        %1122 = vmatpush1.xpose.msra.mxu0 %v1113
        %1123 = vmatprep.subr.mxu0 0.0
        %1124 = vmatpush1.xpose.msra.mxu0 %v1115
        %1125 = vmatprep.subr.mxu0 0.0
        %1126 = vmatpush1.xpose.msra.mxu0 0.0
        %1127 = vmatprep.subr.mxu0 0.0
        %1128 = vmatpush1.xpose.msra.mxu0 0.0
        %1129 = vmatprep.subr.mxu0 0.0
        %1130 = vmatpush1.xpose.msra.mxu0 0.0
        %1131 = vmatprep.subr.mxu0 0.0
        %1132 = vmatpush1.xpose.msra.mxu0 0.0
        %1133 = vmatprep.subr.mxu0 0.0
        %1134 = vmatpush1.xpose.msra.mxu0 0.0
        %1135 = vmatprep.subr.mxu0 0.0
        %1136 = vmatpush1.xpose.msra.mxu0 0.0
        %1137 = vmatprep.subr.mxu0 0.0
        %1138 = vmatpush1.xpose.msra.mxu0 0.0
        %1139 = vmatprep.subr.mxu0 0.0
        %1140 = vmatpush1.xpose.msra.mxu0 0.0
        %1141 = vmatprep.subr.mxu0 0.0
        %1142 = vmatpush1.xpose.msra.mxu0 0.0
        %1143 = vmatprep.subr.mxu0 0.0
        %1144 = vmatpush1.xpose.msra.mxu0 0.0
        %1145 = vmatprep.subr.mxu0 0.0
        %1146 = vmatpush1.xpose.msra.mxu0 0.0
        %1147 = vmatprep.subr.mxu0 0.0
        %1148 = vmatpush1.xpose.msra.mxu0 0.0
        %1149 = vmatprep.subr.mxu0 0.0
        %1150 = vmatpush1.xpose.msra.mxu0 0.0
        %1151 = vmatprep.subr.mxu0 0.0
        %1152 = vmatpush1.xpose.msra.mxu0 0.0
        %1153 = vmatprep.subr.mxu0 0.0
        %1154 = vmatpush1.xpose.msra.mxu0 0.0
        %1155 = vmatprep.subr.mxu0 0.0
        %1156 = vmatpush1.xpose.msra.mxu0 0.0
        %1157 = vmatprep.subr.mxu0 0.0
        %1158 = vmatpush1.xpose.msra.mxu0 0.0
        %1159 = vmatprep.subr.mxu0 0.0
        %1160 = vmatpush1.xpose.msra.mxu0 0.0
        %1161 = vmatprep.subr.mxu0 0.0
        %1162 = vmatpush1.xpose.msra.mxu0 0.0
        %1163 = vmatprep.subr.mxu0 0.0
        %1164 = vmatpush1.xpose.msra.mxu0 0.0
        %1165 = vmatprep.subr.mxu0 0.0
        %1166 = vmatpush1.xpose.msra.mxu0 0.0
        %1167 = vmatprep.subr.mxu0 0.0
        %1168 = vmatpush1.xpose.msra.mxu0 0.0
        %1169 = vmatprep.subr.mxu0 0.0
        %1170 = vmatpush1.xpose.msra.mxu0 0.0
        %1171 = vmatprep.subr.mxu0 0.0
        %1172 = vmatpush1.xpose.msra.mxu0 0.0
        %1173 = vmatprep.subr.mxu0 0.0
        %1174 = vmatpush1.xpose.msra.mxu0 0.0
        %1175 = vmatprep.subr.mxu0 0.0
        %1176 = vmatpush1.xpose.msra.mxu0 0.0
        %1177 = vmatprep.subr.mxu0 0.0
        %1178 = vmatpush1.xpose.msra.mxu0 0.0
        %1179 = vmatprep.subr.mxu0 0.0
        %1180 = vmatpush1.xpose.msra.mxu0 0.0
        %1181 = vmatprep.mubr.f32.mxu0 0.0
        %1182 = vmatmul.mubr.f32.gmra.mrb[0].mxu0 %v1107
        %v1183 = vpop.f32.mrb[0].mxu0
        %v1184 = vadd.f32 %v946, %v1183
        %v1185 = vpop.f32.mrb[0].mxu0
        %1186 = vdwg.mxu0
        %v1187 = vsel %vm508, %v914, 0
        %v1189 = vsel %vm508, %v936, 0
        %v1191 = vsel %vm508, %v938, 0
        %v1193 = vsel %vm508, %v940, 0
        %v1195 = vsel %vm508, %v942, 0
        %1197 = vmatprep.subr.mxu0 0.0
        %1198 = vmatpush1.xpose.msra.mxu0 %v1189
        %1199 = vmatprep.subr.mxu0 0.0
        %1200 = vmatpush1.xpose.msra.mxu0 %v1191
        %1201 = vmatprep.subr.mxu0 0.0
        %1202 = vmatpush1.xpose.msra.mxu0 %v1193
        %1203 = vmatprep.subr.mxu0 0.0
        %1204 = vmatpush1.xpose.msra.mxu0 %v1195
        %1205 = vmatprep.subr.mxu0 0.0
        %1206 = vmatpush1.xpose.msra.mxu0 0.0
        %1207 = vmatprep.subr.mxu0 0.0
        %1208 = vmatpush1.xpose.msra.mxu0 0.0
        %1209 = vmatprep.subr.mxu0 0.0
        %1210 = vmatpush1.xpose.msra.mxu0 0.0
        %1211 = vmatprep.subr.mxu0 0.0
        %1212 = vmatpush1.xpose.msra.mxu0 0.0
        %1213 = vmatprep.subr.mxu0 0.0
        %1214 = vmatpush1.xpose.msra.mxu0 0.0
        %1215 = vmatprep.subr.mxu0 0.0
        %1216 = vmatpush1.xpose.msra.mxu0 0.0
        %1217 = vmatprep.subr.mxu0 0.0
        %1218 = vmatpush1.xpose.msra.mxu0 0.0
        %1219 = vmatprep.subr.mxu0 0.0
        %1220 = vmatpush1.xpose.msra.mxu0 0.0
        %1221 = vmatprep.subr.mxu0 0.0
        %1222 = vmatpush1.xpose.msra.mxu0 0.0
        %1223 = vmatprep.subr.mxu0 0.0
        %1224 = vmatpush1.xpose.msra.mxu0 0.0
        %1225 = vmatprep.subr.mxu0 0.0
        %1226 = vmatpush1.xpose.msra.mxu0 0.0
        %1227 = vmatprep.subr.mxu0 0.0
        %1228 = vmatpush1.xpose.msra.mxu0 0.0
        %1229 = vmatprep.subr.mxu0 0.0
        %1230 = vmatpush1.xpose.msra.mxu0 0.0
        %1231 = vmatprep.subr.mxu0 0.0
        %1232 = vmatpush1.xpose.msra.mxu0 0.0
        %1233 = vmatprep.subr.mxu0 0.0
        %1234 = vmatpush1.xpose.msra.mxu0 0.0
        %1235 = vmatprep.subr.mxu0 0.0
        %1236 = vmatpush1.xpose.msra.mxu0 0.0
        %1237 = vmatprep.subr.mxu0 0.0
        %1238 = vmatpush1.xpose.msra.mxu0 0.0
        %1239 = vmatprep.subr.mxu0 0.0
        %1240 = vmatpush1.xpose.msra.mxu0 0.0
        %1241 = vmatprep.subr.mxu0 0.0
        %1242 = vmatpush1.xpose.msra.mxu0 0.0
        %1243 = vmatprep.subr.mxu0 0.0
        %1244 = vmatpush1.xpose.msra.mxu0 0.0
        %1245 = vmatprep.subr.mxu0 0.0
        %1246 = vmatpush1.xpose.msra.mxu0 0.0
        %1247 = vmatprep.subr.mxu0 0.0
        %1248 = vmatpush1.xpose.msra.mxu0 0.0
        %1249 = vmatprep.subr.mxu0 0.0
        %1250 = vmatpush1.xpose.msra.mxu0 0.0
        %1251 = vmatprep.subr.mxu0 0.0
        %1252 = vmatpush1.xpose.msra.mxu0 0.0
        %1253 = vmatprep.subr.mxu0 0.0
        %1254 = vmatpush1.xpose.msra.mxu0 0.0
        %1255 = vmatprep.subr.mxu0 0.0
        %1256 = vmatpush1.xpose.msra.mxu0 0.0
        %1257 = vmatprep.subr.mxu0 0.0
        %1258 = vmatpush1.xpose.msra.mxu0 0.0
        %1259 = vmatprep.subr.mxu0 0.0
        %1260 = vmatpush1.xpose.msra.mxu0 0.0
        %1261 = vmatprep.mubr.f32.mxu0 0.0
        %1262 = vmatmul.mubr.f32.gmra.mrb[0].mxu0 %v1187
        %v1263 = vpop.f32.mrb[0].mxu0
        %v1264 = vadd.f32 %v946, %v1263
        %v1265 = vpop.f32.mrb[0].mxu0
        %1266 = vdwg.mxu0
        %v1267 = vsel %vm422, %v1024, -inf
        %1268 = vmax.xlane.f32.xlu0 %v1267
        %v1269 = vpop.xlane.xlu0 %1268
        %v1270 = vsel %vm422, %v1104, -inf
        %1271 = vmax.xlane.f32.xlu0 %v1270
        %v1272 = vpop.xlane.xlu0 %1271
        %v1273 = vsel %vm422, %v1184, -inf
        %1274 = vmax.xlane.f32.xlu0 %v1273
        %v1275 = vpop.xlane.xlu0 %1274
        %v1276 = vsel %vm422, %v1264, -inf
        %1277 = vmax.xlane.f32.xlu0 %v1276
        %v1278 = vpop.xlane.xlu0 %1277
        %v1279 = vsub.f32 %v1024, %v1269
        %v1280 = vsub.f32 %v1104, %v1272
        %v1281 = vsub.f32 %v1184, %v1275
        %v1282 = vsub.f32 %v1264, %v1278
        %v1283 = vmul.f32 %v1279, 1.442695
        %v1284 = vpow.pop %v1283
        %v1285 = vmul.f32 %v1280, 1.442695
        %v1286 = vpow.pop %v1285
        %v1287 = vmul.f32 %v1281, 1.442695
        %v1288 = vpow.pop %v1287
        %v1289 = vmul.f32 %v1282, 1.442695
        %v1290 = vpow.pop %v1289
        %v1291 = vsel %vm422, %v1284, 0.0
        %1292 = vadd.xlane.f32.xlu0 %v1291
        %v1293 = vpop.xlane.xlu0 %1292
        %v1294 = vsel %vm422, %v1286, 0.0
        %1295 = vadd.xlane.f32.xlu0 %v1294
        %v1296 = vpop.xlane.xlu0 %1295
        %v1297 = vsel %vm422, %v1288, 0.0
        %1298 = vadd.xlane.f32.xlu0 %v1297
        %v1299 = vpop.xlane.xlu0 %1298
        %v1300 = vsel %vm422, %v1290, 0.0
        %1301 = vadd.xlane.f32.xlu0 %v1300
        %v1302 = vpop.xlane.xlu0 %1301
        %v1303 = vrcp.pop %v1293
        %v1304 = vmul.f32 %v1284, %v1303
        %v1305 = vrcp.pop %v1296
        %v1306 = vmul.f32 %v1286, %v1305
        %v1307 = vrcp.pop %v1299
        %v1308 = vmul.f32 %v1288, %v1307
        %v1309 = vrcp.pop %v1302
        %v1310 = vmul.f32 %v1290, %v1309
        %1311 = vrot.lane.b32.xlu0 %v890, 96
        %v1312 = vpop.permute.xlu0 %1311
        %1313 = vrot.lane.b32.xlu0 %v895, 96
        %v1314 = vpop.permute.xlu0 %1313
        %1315 = vrot.lane.b32.xlu0 %v900, 96
        %v1316 = vpop.permute.xlu0 %1315
        %1317 = vrot.lane.b32.xlu0 %v905, 96
        %v1318 = vpop.permute.xlu0 %1317
        %v1324 = vsel %vm422, %v1304, 0
        %1326 = vmatprep.subr.mxu0 0.0
        %1327 = vmatpush1.msra.mxu0 %v1312
        %1328 = vmatprep.subr.mxu0 0.0
        %1329 = vmatpush1.msra.mxu0 %v1314
        %1330 = vmatprep.subr.mxu0 0.0
        %1331 = vmatpush1.msra.mxu0 %v1316
        %1332 = vmatprep.subr.mxu0 0.0
        %1333 = vmatpush1.msra.mxu0 %v1318
        %1334 = vmatprep.subr.mxu0 0.0
        %1335 = vmatpush1.msra.mxu0 0.0
        %1336 = vmatprep.subr.mxu0 0.0
        %1337 = vmatpush1.msra.mxu0 0.0
        %1338 = vmatprep.subr.mxu0 0.0
        %1339 = vmatpush1.msra.mxu0 0.0
        %1340 = vmatprep.subr.mxu0 0.0
        %1341 = vmatpush1.msra.mxu0 0.0
        %1342 = vmatprep.subr.mxu0 0.0
        %1343 = vmatpush1.msra.mxu0 0.0
        %1344 = vmatprep.subr.mxu0 0.0
        %1345 = vmatpush1.msra.mxu0 0.0
        %1346 = vmatprep.subr.mxu0 0.0
        %1347 = vmatpush1.msra.mxu0 0.0
        %1348 = vmatprep.subr.mxu0 0.0
        %1349 = vmatpush1.msra.mxu0 0.0
        %1350 = vmatprep.subr.mxu0 0.0
        %1351 = vmatpush1.msra.mxu0 0.0
        %1352 = vmatprep.subr.mxu0 0.0
        %1353 = vmatpush1.msra.mxu0 0.0
        %1354 = vmatprep.subr.mxu0 0.0
        %1355 = vmatpush1.msra.mxu0 0.0
        %1356 = vmatprep.subr.mxu0 0.0
        %1357 = vmatpush1.msra.mxu0 0.0
        %1358 = vmatprep.subr.mxu0 0.0
        %1359 = vmatpush1.msra.mxu0 0.0
        %1360 = vmatprep.subr.mxu0 0.0
        %1361 = vmatpush1.msra.mxu0 0.0
        %1362 = vmatprep.subr.mxu0 0.0
        %1363 = vmatpush1.msra.mxu0 0.0
        %1364 = vmatprep.subr.mxu0 0.0
        %1365 = vmatpush1.msra.mxu0 0.0
        %1366 = vmatprep.subr.mxu0 0.0
        %1367 = vmatpush1.msra.mxu0 0.0
        %1368 = vmatprep.subr.mxu0 0.0
        %1369 = vmatpush1.msra.mxu0 0.0
        %1370 = vmatprep.subr.mxu0 0.0
        %1371 = vmatpush1.msra.mxu0 0.0
        %1372 = vmatprep.subr.mxu0 0.0
        %1373 = vmatpush1.msra.mxu0 0.0
        %1374 = vmatprep.subr.mxu0 0.0
        %1375 = vmatpush1.msra.mxu0 0.0
        %1376 = vmatprep.subr.mxu0 0.0
        %1377 = vmatpush1.msra.mxu0 0.0
        %1378 = vmatprep.subr.mxu0 0.0
        %1379 = vmatpush1.msra.mxu0 0.0
        %1380 = vmatprep.subr.mxu0 0.0
        %1381 = vmatpush1.msra.mxu0 0.0
        %1382 = vmatprep.subr.mxu0 0.0
        %1383 = vmatpush1.msra.mxu0 0.0
        %1384 = vmatprep.subr.mxu0 0.0
        %1385 = vmatpush1.msra.mxu0 0.0
        %1386 = vmatprep.subr.mxu0 0.0
        %1387 = vmatpush1.msra.mxu0 0.0
        %1388 = vmatprep.subr.mxu0 0.0
        %1389 = vmatpush1.msra.mxu0 0.0
        %1390 = vmatprep.mubr.f32.mxu0 0.0
        %1391 = vmatmul.mubr.f32.gmra.mrb[0].mxu0 %v1324
        %v1392 = vpop.f32.mrb[0].mxu0
        %v1393 = vadd.f32 0.0, %v1392
        %v1394 = vpop.f32.mrb[0].mxu0
        %1395 = vdwg.mxu0
        %1396 = vrot.lane.b32.xlu0 %v920, 96
        %v1397 = vpop.permute.xlu0 %1396
        %1398 = vrot.lane.b32.xlu0 %v922, 96
        %v1399 = vpop.permute.xlu0 %1398
        %1400 = vrot.lane.b32.xlu0 %v924, 96
        %v1401 = vpop.permute.xlu0 %1400
        %1402 = vrot.lane.b32.xlu0 %v926, 96
        %v1403 = vpop.permute.xlu0 %1402
        %v1409 = vsel %vm422, %v1306, 0
        %1411 = vmatprep.subr.mxu0 0.0
        %1412 = vmatpush1.msra.mxu0 %v1397
        %1413 = vmatprep.subr.mxu0 0.0
        %1414 = vmatpush1.msra.mxu0 %v1399
        %1415 = vmatprep.subr.mxu0 0.0
        %1416 = vmatpush1.msra.mxu0 %v1401
        %1417 = vmatprep.subr.mxu0 0.0
        %1418 = vmatpush1.msra.mxu0 %v1403
        %1419 = vmatprep.subr.mxu0 0.0
        %1420 = vmatpush1.msra.mxu0 0.0
        %1421 = vmatprep.subr.mxu0 0.0
        %1422 = vmatpush1.msra.mxu0 0.0
        %1423 = vmatprep.subr.mxu0 0.0
        %1424 = vmatpush1.msra.mxu0 0.0
        %1425 = vmatprep.subr.mxu0 0.0
        %1426 = vmatpush1.msra.mxu0 0.0
        %1427 = vmatprep.subr.mxu0 0.0
        %1428 = vmatpush1.msra.mxu0 0.0
        %1429 = vmatprep.subr.mxu0 0.0
        %1430 = vmatpush1.msra.mxu0 0.0
        %1431 = vmatprep.subr.mxu0 0.0
        %1432 = vmatpush1.msra.mxu0 0.0
        %1433 = vmatprep.subr.mxu0 0.0
        %1434 = vmatpush1.msra.mxu0 0.0
        %1435 = vmatprep.subr.mxu0 0.0
        %1436 = vmatpush1.msra.mxu0 0.0
        %1437 = vmatprep.subr.mxu0 0.0
        %1438 = vmatpush1.msra.mxu0 0.0
        %1439 = vmatprep.subr.mxu0 0.0
        %1440 = vmatpush1.msra.mxu0 0.0
        %1441 = vmatprep.subr.mxu0 0.0
        %1442 = vmatpush1.msra.mxu0 0.0
        %1443 = vmatprep.subr.mxu0 0.0
        %1444 = vmatpush1.msra.mxu0 0.0
        %1445 = vmatprep.subr.mxu0 0.0
        %1446 = vmatpush1.msra.mxu0 0.0
        %1447 = vmatprep.subr.mxu0 0.0
        %1448 = vmatpush1.msra.mxu0 0.0
        %1449 = vmatprep.subr.mxu0 0.0
        %1450 = vmatpush1.msra.mxu0 0.0
        %1451 = vmatprep.subr.mxu0 0.0
        %1452 = vmatpush1.msra.mxu0 0.0
        %1453 = vmatprep.subr.mxu0 0.0
        %1454 = vmatpush1.msra.mxu0 0.0
        %1455 = vmatprep.subr.mxu0 0.0
        %1456 = vmatpush1.msra.mxu0 0.0
        %1457 = vmatprep.subr.mxu0 0.0
        %1458 = vmatpush1.msra.mxu0 0.0
        %1459 = vmatprep.subr.mxu0 0.0
        %1460 = vmatpush1.msra.mxu0 0.0
        %1461 = vmatprep.subr.mxu0 0.0
        %1462 = vmatpush1.msra.mxu0 0.0
        %1463 = vmatprep.subr.mxu0 0.0
        %1464 = vmatpush1.msra.mxu0 0.0
        %1465 = vmatprep.subr.mxu0 0.0
        %1466 = vmatpush1.msra.mxu0 0.0
        %1467 = vmatprep.subr.mxu0 0.0
        %1468 = vmatpush1.msra.mxu0 0.0
        %1469 = vmatprep.subr.mxu0 0.0
        %1470 = vmatpush1.msra.mxu0 0.0
        %1471 = vmatprep.subr.mxu0 0.0
        %1472 = vmatpush1.msra.mxu0 0.0
        %1473 = vmatprep.subr.mxu0 0.0
        %1474 = vmatpush1.msra.mxu0 0.0
        %1475 = vmatprep.mubr.f32.mxu0 0.0
        %1476 = vmatmul.mubr.f32.gmra.mrb[0].mxu0 %v1409
        %v1477 = vpop.f32.mrb[0].mxu0
        %v1478 = vadd.f32 0.0, %v1477
        %v1479 = vpop.f32.mrb[0].mxu0
        %1480 = vdwg.mxu0
        %1481 = vrot.lane.b32.xlu0 %v928, 96
        %v1482 = vpop.permute.xlu0 %1481
        %1483 = vrot.lane.b32.xlu0 %v930, 96
        %v1484 = vpop.permute.xlu0 %1483
        %1485 = vrot.lane.b32.xlu0 %v932, 96
        %v1486 = vpop.permute.xlu0 %1485
        %1487 = vrot.lane.b32.xlu0 %v934, 96
        %v1488 = vpop.permute.xlu0 %1487
        %v1494 = vsel %vm422, %v1308, 0
        %1496 = vmatprep.subr.mxu0 0.0
        %1497 = vmatpush1.msra.mxu0 %v1482
        %1498 = vmatprep.subr.mxu0 0.0
        %1499 = vmatpush1.msra.mxu0 %v1484
        %1500 = vmatprep.subr.mxu0 0.0
        %1501 = vmatpush1.msra.mxu0 %v1486
        %1502 = vmatprep.subr.mxu0 0.0
        %1503 = vmatpush1.msra.mxu0 %v1488
        %1504 = vmatprep.subr.mxu0 0.0
        %1505 = vmatpush1.msra.mxu0 0.0
        %1506 = vmatprep.subr.mxu0 0.0
        %1507 = vmatpush1.msra.mxu0 0.0
        %1508 = vmatprep.subr.mxu0 0.0
        %1509 = vmatpush1.msra.mxu0 0.0
        %1510 = vmatprep.subr.mxu0 0.0
        %1511 = vmatpush1.msra.mxu0 0.0
        %1512 = vmatprep.subr.mxu0 0.0
        %1513 = vmatpush1.msra.mxu0 0.0
        %1514 = vmatprep.subr.mxu0 0.0
        %1515 = vmatpush1.msra.mxu0 0.0
        %1516 = vmatprep.subr.mxu0 0.0
        %1517 = vmatpush1.msra.mxu0 0.0
        %1518 = vmatprep.subr.mxu0 0.0
        %1519 = vmatpush1.msra.mxu0 0.0
        %1520 = vmatprep.subr.mxu0 0.0
        %1521 = vmatpush1.msra.mxu0 0.0
        %1522 = vmatprep.subr.mxu0 0.0
        %1523 = vmatpush1.msra.mxu0 0.0
        %1524 = vmatprep.subr.mxu0 0.0
        %1525 = vmatpush1.msra.mxu0 0.0
        %1526 = vmatprep.subr.mxu0 0.0
        %1527 = vmatpush1.msra.mxu0 0.0
        %1528 = vmatprep.subr.mxu0 0.0
        %1529 = vmatpush1.msra.mxu0 0.0
        %1530 = vmatprep.subr.mxu0 0.0
        %1531 = vmatpush1.msra.mxu0 0.0
        %1532 = vmatprep.subr.mxu0 0.0
        %1533 = vmatpush1.msra.mxu0 0.0
        %1534 = vmatprep.subr.mxu0 0.0
        %1535 = vmatpush1.msra.mxu0 0.0
        %1536 = vmatprep.subr.mxu0 0.0
        %1537 = vmatpush1.msra.mxu0 0.0
        %1538 = vmatprep.subr.mxu0 0.0
        %1539 = vmatpush1.msra.mxu0 0.0
        %1540 = vmatprep.subr.mxu0 0.0
        %1541 = vmatpush1.msra.mxu0 0.0
        %1542 = vmatprep.subr.mxu0 0.0
        %1543 = vmatpush1.msra.mxu0 0.0
        %1544 = vmatprep.subr.mxu0 0.0
        %1545 = vmatpush1.msra.mxu0 0.0
        %1546 = vmatprep.subr.mxu0 0.0
        %1547 = vmatpush1.msra.mxu0 0.0
        %1548 = vmatprep.subr.mxu0 0.0
        %1549 = vmatpush1.msra.mxu0 0.0
        %1550 = vmatprep.subr.mxu0 0.0
        %1551 = vmatpush1.msra.mxu0 0.0
        %1552 = vmatprep.subr.mxu0 0.0
        %1553 = vmatpush1.msra.mxu0 0.0
        %1554 = vmatprep.subr.mxu0 0.0
        %1555 = vmatpush1.msra.mxu0 0.0
        %1556 = vmatprep.subr.mxu0 0.0
        %1557 = vmatpush1.msra.mxu0 0.0
        %1558 = vmatprep.subr.mxu0 0.0
        %1559 = vmatpush1.msra.mxu0 0.0
        %1560 = vmatprep.mubr.f32.mxu0 0.0
        %1561 = vmatmul.mubr.f32.gmra.mrb[0].mxu0 %v1494
        %v1562 = vpop.f32.mrb[0].mxu0
        %v1563 = vadd.f32 0.0, %v1562
        %v1564 = vpop.f32.mrb[0].mxu0
        %1565 = vdwg.mxu0
        %1566 = vrot.lane.b32.xlu0 %v936, 96
        %v1567 = vpop.permute.xlu0 %1566
        %1568 = vrot.lane.b32.xlu0 %v938, 96
        %v1569 = vpop.permute.xlu0 %1568
        %1570 = vrot.lane.b32.xlu0 %v940, 96
        %v1571 = vpop.permute.xlu0 %1570
        %1572 = vrot.lane.b32.xlu0 %v942, 96
        %v1573 = vpop.permute.xlu0 %1572
        %v1579 = vsel %vm422, %v1310, 0
        %1581 = vmatprep.subr.mxu0 0.0
        %1582 = vmatpush1.msra.mxu0 %v1567
        %1583 = vmatprep.subr.mxu0 0.0
        %1584 = vmatpush1.msra.mxu0 %v1569
        %1585 = vmatprep.subr.mxu0 0.0
        %1586 = vmatpush1.msra.mxu0 %v1571
        %1587 = vmatprep.subr.mxu0 0.0
        %1588 = vmatpush1.msra.mxu0 %v1573
        %1589 = vmatprep.subr.mxu0 0.0
        %1590 = vmatpush1.msra.mxu0 0.0
        %1591 = vmatprep.subr.mxu0 0.0
        %1592 = vmatpush1.msra.mxu0 0.0
        %1593 = vmatprep.subr.mxu0 0.0
        %1594 = vmatpush1.msra.mxu0 0.0
        %1595 = vmatprep.subr.mxu0 0.0
        %1596 = vmatpush1.msra.mxu0 0.0
        %1597 = vmatprep.subr.mxu0 0.0
        %1598 = vmatpush1.msra.mxu0 0.0
        %1599 = vmatprep.subr.mxu0 0.0
        %1600 = vmatpush1.msra.mxu0 0.0
        %1601 = vmatprep.subr.mxu0 0.0
        %1602 = vmatpush1.msra.mxu0 0.0
        %1603 = vmatprep.subr.mxu0 0.0
        %1604 = vmatpush1.msra.mxu0 0.0
        %1605 = vmatprep.subr.mxu0 0.0
        %1606 = vmatpush1.msra.mxu0 0.0
        %1607 = vmatprep.subr.mxu0 0.0
        %1608 = vmatpush1.msra.mxu0 0.0
        %1609 = vmatprep.subr.mxu0 0.0
        %1610 = vmatpush1.msra.mxu0 0.0
        %1611 = vmatprep.subr.mxu0 0.0
        %1612 = vmatpush1.msra.mxu0 0.0
        %1613 = vmatprep.subr.mxu0 0.0
        %1614 = vmatpush1.msra.mxu0 0.0
        %1615 = vmatprep.subr.mxu0 0.0
        %1616 = vmatpush1.msra.mxu0 0.0
        %1617 = vmatprep.subr.mxu0 0.0
        %1618 = vmatpush1.msra.mxu0 0.0
        %1619 = vmatprep.subr.mxu0 0.0
        %1620 = vmatpush1.msra.mxu0 0.0
        %1621 = vmatprep.subr.mxu0 0.0
        %1622 = vmatpush1.msra.mxu0 0.0
        %1623 = vmatprep.subr.mxu0 0.0
        %1624 = vmatpush1.msra.mxu0 0.0
        %1625 = vmatprep.subr.mxu0 0.0
        %1626 = vmatpush1.msra.mxu0 0.0
        %1627 = vmatprep.subr.mxu0 0.0
        %1628 = vmatpush1.msra.mxu0 0.0
        %1629 = vmatprep.subr.mxu0 0.0
        %1630 = vmatpush1.msra.mxu0 0.0
        %1631 = vmatprep.subr.mxu0 0.0
        %1632 = vmatpush1.msra.mxu0 0.0
        %1633 = vmatprep.subr.mxu0 0.0
        %1634 = vmatpush1.msra.mxu0 0.0
        %1635 = vmatprep.subr.mxu0 0.0
        %1636 = vmatpush1.msra.mxu0 0.0
        %1637 = vmatprep.subr.mxu0 0.0
        %1638 = vmatpush1.msra.mxu0 0.0
        %1639 = vmatprep.subr.mxu0 0.0
        %1640 = vmatpush1.msra.mxu0 0.0
        %1641 = vmatprep.subr.mxu0 0.0
        %1642 = vmatpush1.msra.mxu0 0.0
        %1643 = vmatprep.subr.mxu0 0.0
        %1644 = vmatpush1.msra.mxu0 0.0
        %1645 = vmatprep.mubr.f32.mxu0 0.0
        %1646 = vmatmul.mubr.f32.gmra.mrb[0].mxu0 %v1579
        %v1647 = vpop.f32.mrb[0].mxu0
        %v1648 = vadd.f32 0.0, %v1647
        %v1649 = vpop.f32.mrb[0].mxu0
        %1650 = vdwg.mxu0
        %v1651 = vld [vmem:[#allocation5] sm:$0xff]
        %v1652 = vld [vmem:[#allocation5 + $0x8] sm:$0xff]
        %v1653 = vld [vmem:[#allocation5 + $0x10] sm:$0xff]
        %v1654 = vld [vmem:[#allocation5 + $0x18] sm:$0xff]
        %v1656 = vsel %vm508, %v1478, 0
        %1658 = vmatprep.subr.mxu0 0.0
        %1659 = vmatpush1.msra.mxu0 %v1652
        %1660 = vmatprep.subr.mxu0 0.0
        %1661 = vmatpush1.msra.mxu0 0.0
        %1662 = vmatprep.subr.mxu0 0.0
        %1663 = vmatpush1.msra.mxu0 0.0
        %1664 = vmatprep.subr.mxu0 0.0
        %1665 = vmatpush1.msra.mxu0 0.0
        %1666 = vmatprep.subr.mxu0 0.0
        %1667 = vmatpush1.msra.mxu0 0.0
        %1668 = vmatprep.subr.mxu0 0.0
        %1669 = vmatpush1.msra.mxu0 0.0
        %1670 = vmatprep.subr.mxu0 0.0
        %1671 = vmatpush1.msra.mxu0 0.0
        %1672 = vmatprep.subr.mxu0 0.0
        %1673 = vmatpush1.msra.mxu0 0.0
        %1674 = vmatprep.subr.mxu0 0.0
        %1675 = vmatpush1.msra.mxu0 0.0
        %1676 = vmatprep.subr.mxu0 0.0
        %1677 = vmatpush1.msra.mxu0 0.0
        %1678 = vmatprep.subr.mxu0 0.0
        %1679 = vmatpush1.msra.mxu0 0.0
        %1680 = vmatprep.subr.mxu0 0.0
        %1681 = vmatpush1.msra.mxu0 0.0
        %1682 = vmatprep.subr.mxu0 0.0
        %1683 = vmatpush1.msra.mxu0 0.0
        %1684 = vmatprep.subr.mxu0 0.0
        %1685 = vmatpush1.msra.mxu0 0.0
        %1686 = vmatprep.subr.mxu0 0.0
        %1687 = vmatpush1.msra.mxu0 0.0
        %1688 = vmatprep.subr.mxu0 0.0
        %1689 = vmatpush1.msra.mxu0 0.0
        %1690 = vmatprep.subr.mxu0 0.0
        %1691 = vmatpush1.msra.mxu0 0.0
        %1692 = vmatprep.subr.mxu0 0.0
        %1693 = vmatpush1.msra.mxu0 0.0
        %1694 = vmatprep.subr.mxu0 0.0
        %1695 = vmatpush1.msra.mxu0 0.0
        %1696 = vmatprep.subr.mxu0 0.0
        %1697 = vmatpush1.msra.mxu0 0.0
        %1698 = vmatprep.subr.mxu0 0.0
        %1699 = vmatpush1.msra.mxu0 0.0
        %1700 = vmatprep.subr.mxu0 0.0
        %1701 = vmatpush1.msra.mxu0 0.0
        %1702 = vmatprep.subr.mxu0 0.0
        %1703 = vmatpush1.msra.mxu0 0.0
        %1704 = vmatprep.subr.mxu0 0.0
        %1705 = vmatpush1.msra.mxu0 0.0
        %1706 = vmatprep.subr.mxu0 0.0
        %1707 = vmatpush1.msra.mxu0 0.0
        %1708 = vmatprep.subr.mxu0 0.0
        %1709 = vmatpush1.msra.mxu0 0.0
        %1710 = vmatprep.subr.mxu0 0.0
        %1711 = vmatpush1.msra.mxu0 0.0
        %1712 = vmatprep.subr.mxu0 0.0
        %1713 = vmatpush1.msra.mxu0 0.0
        %1714 = vmatprep.subr.mxu0 0.0
        %1715 = vmatpush1.msra.mxu0 0.0
        %1716 = vmatprep.subr.mxu0 0.0
        %1717 = vmatpush1.msra.mxu0 0.0
        %1718 = vmatprep.subr.mxu0 0.0
        %1719 = vmatpush1.msra.mxu0 0.0
        %1720 = vmatprep.subr.mxu0 0.0
        %1721 = vmatpush1.msra.mxu0 0.0
        %1722 = vmatprep.mubr.f32.mxu0 0.0
        %1723 = vmatmul.mubr.f32.gmra.mrb[0].mxu0 %v1656
        %v1724 = vpop.f32.mrb[0].mxu0
        %v1725 = vadd.f32 0.0, %v1724
        %v1726 = vpop.f32.mrb[0].mxu0
        %1727 = vdwg.mxu0
        %v1729 = vsel %vm508, %v1393, 0
        %1731 = vmatprep.subr.mxu0 0.0
        %1732 = vmatpush1.msra.mxu0 %v1651
        %1733 = vmatprep.subr.mxu0 0.0
        %1734 = vmatpush1.msra.mxu0 0.0
        %1735 = vmatprep.subr.mxu0 0.0
        %1736 = vmatpush1.msra.mxu0 0.0
        %1737 = vmatprep.subr.mxu0 0.0
        %1738 = vmatpush1.msra.mxu0 0.0
        %1739 = vmatprep.subr.mxu0 0.0
        %1740 = vmatpush1.msra.mxu0 0.0
        %1741 = vmatprep.subr.mxu0 0.0
        %1742 = vmatpush1.msra.mxu0 0.0
        %1743 = vmatprep.subr.mxu0 0.0
        %1744 = vmatpush1.msra.mxu0 0.0
        %1745 = vmatprep.subr.mxu0 0.0
        %1746 = vmatpush1.msra.mxu0 0.0
        %1747 = vmatprep.subr.mxu0 0.0
        %1748 = vmatpush1.msra.mxu0 0.0
        %1749 = vmatprep.subr.mxu0 0.0
        %1750 = vmatpush1.msra.mxu0 0.0
        %1751 = vmatprep.subr.mxu0 0.0
        %1752 = vmatpush1.msra.mxu0 0.0
        %1753 = vmatprep.subr.mxu0 0.0
        %1754 = vmatpush1.msra.mxu0 0.0
        %1755 = vmatprep.subr.mxu0 0.0
        %1756 = vmatpush1.msra.mxu0 0.0
        %1757 = vmatprep.subr.mxu0 0.0
        %1758 = vmatpush1.msra.mxu0 0.0
        %1759 = vmatprep.subr.mxu0 0.0
        %1760 = vmatpush1.msra.mxu0 0.0
        %1761 = vmatprep.subr.mxu0 0.0
        %1762 = vmatpush1.msra.mxu0 0.0
        %1763 = vmatprep.subr.mxu0 0.0
        %1764 = vmatpush1.msra.mxu0 0.0
        %1765 = vmatprep.subr.mxu0 0.0
        %1766 = vmatpush1.msra.mxu0 0.0
        %1767 = vmatprep.subr.mxu0 0.0
        %1768 = vmatpush1.msra.mxu0 0.0
        %1769 = vmatprep.subr.mxu0 0.0
        %1770 = vmatpush1.msra.mxu0 0.0
        %1771 = vmatprep.subr.mxu0 0.0
        %1772 = vmatpush1.msra.mxu0 0.0
        %1773 = vmatprep.subr.mxu0 0.0
        %1774 = vmatpush1.msra.mxu0 0.0
        %1775 = vmatprep.subr.mxu0 0.0
        %1776 = vmatpush1.msra.mxu0 0.0
        %1777 = vmatprep.subr.mxu0 0.0
        %1778 = vmatpush1.msra.mxu0 0.0
        %1779 = vmatprep.subr.mxu0 0.0
        %1780 = vmatpush1.msra.mxu0 0.0
        %1781 = vmatprep.subr.mxu0 0.0
        %1782 = vmatpush1.msra.mxu0 0.0
        %1783 = vmatprep.subr.mxu0 0.0
        %1784 = vmatpush1.msra.mxu0 0.0
        %1785 = vmatprep.subr.mxu0 0.0
        %1786 = vmatpush1.msra.mxu0 0.0
        %1787 = vmatprep.subr.mxu0 0.0
        %1788 = vmatpush1.msra.mxu0 0.0
        %1789 = vmatprep.subr.mxu0 0.0
        %1790 = vmatpush1.msra.mxu0 0.0
        %1791 = vmatprep.subr.mxu0 0.0
        %1792 = vmatpush1.msra.mxu0 0.0
        %1793 = vmatprep.subr.mxu0 0.0
        %1794 = vmatpush1.msra.mxu0 0.0
        %1795 = vmatprep.mubr.f32.mxu0 0.0
        %1796 = vmatmul.mubr.f32.gmra.mrb[0].mxu0 %v1729
        %v1797 = vpop.f32.mrb[0].mxu0
        %v1798 = vadd.f32 %v1725, %v1797
        %v1799 = vpop.f32.mrb[0].mxu0
        %1800 = vdwg.mxu0
        %v1802 = vsel %vm508, %v1563, 0
        %1804 = vmatprep.subr.mxu0 0.0
        %1805 = vmatpush1.msra.mxu0 %v1653
        %1806 = vmatprep.subr.mxu0 0.0
        %1807 = vmatpush1.msra.mxu0 0.0
        %1808 = vmatprep.subr.mxu0 0.0
        %1809 = vmatpush1.msra.mxu0 0.0
        %1810 = vmatprep.subr.mxu0 0.0
        %1811 = vmatpush1.msra.mxu0 0.0
        %1812 = vmatprep.subr.mxu0 0.0
        %1813 = vmatpush1.msra.mxu0 0.0
        %1814 = vmatprep.subr.mxu0 0.0
        %1815 = vmatpush1.msra.mxu0 0.0
        %1816 = vmatprep.subr.mxu0 0.0
        %1817 = vmatpush1.msra.mxu0 0.0
        %1818 = vmatprep.subr.mxu0 0.0
        %1819 = vmatpush1.msra.mxu0 0.0
        %1820 = vmatprep.subr.mxu0 0.0
        %1821 = vmatpush1.msra.mxu0 0.0
        %1822 = vmatprep.subr.mxu0 0.0
        %1823 = vmatpush1.msra.mxu0 0.0
        %1824 = vmatprep.subr.mxu0 0.0
        %1825 = vmatpush1.msra.mxu0 0.0
        %1826 = vmatprep.subr.mxu0 0.0
        %1827 = vmatpush1.msra.mxu0 0.0
        %1828 = vmatprep.subr.mxu0 0.0
        %1829 = vmatpush1.msra.mxu0 0.0
        %1830 = vmatprep.subr.mxu0 0.0
        %1831 = vmatpush1.msra.mxu0 0.0
        %1832 = vmatprep.subr.mxu0 0.0
        %1833 = vmatpush1.msra.mxu0 0.0
        %1834 = vmatprep.subr.mxu0 0.0
        %1835 = vmatpush1.msra.mxu0 0.0
        %1836 = vmatprep.subr.mxu0 0.0
        %1837 = vmatpush1.msra.mxu0 0.0
        %1838 = vmatprep.subr.mxu0 0.0
        %1839 = vmatpush1.msra.mxu0 0.0
        %1840 = vmatprep.subr.mxu0 0.0
        %1841 = vmatpush1.msra.mxu0 0.0
        %1842 = vmatprep.subr.mxu0 0.0
        %1843 = vmatpush1.msra.mxu0 0.0
        %1844 = vmatprep.subr.mxu0 0.0
        %1845 = vmatpush1.msra.mxu0 0.0
        %1846 = vmatprep.subr.mxu0 0.0
        %1847 = vmatpush1.msra.mxu0 0.0
        %1848 = vmatprep.subr.mxu0 0.0
        %1849 = vmatpush1.msra.mxu0 0.0
        %1850 = vmatprep.subr.mxu0 0.0
        %1851 = vmatpush1.msra.mxu0 0.0
        %1852 = vmatprep.subr.mxu0 0.0
        %1853 = vmatpush1.msra.mxu0 0.0
        %1854 = vmatprep.subr.mxu0 0.0
        %1855 = vmatpush1.msra.mxu0 0.0
        %1856 = vmatprep.subr.mxu0 0.0
        %1857 = vmatpush1.msra.mxu0 0.0
        %1858 = vmatprep.subr.mxu0 0.0
        %1859 = vmatpush1.msra.mxu0 0.0
        %1860 = vmatprep.subr.mxu0 0.0
        %1861 = vmatpush1.msra.mxu0 0.0
        %1862 = vmatprep.subr.mxu0 0.0
        %1863 = vmatpush1.msra.mxu0 0.0
        %1864 = vmatprep.subr.mxu0 0.0
        %1865 = vmatpush1.msra.mxu0 0.0
        %1866 = vmatprep.subr.mxu0 0.0
        %1867 = vmatpush1.msra.mxu0 0.0
        %1868 = vmatprep.mubr.f32.mxu0 0.0
        %1869 = vmatmul.mubr.f32.gmra.mrb[0].mxu0 %v1802
        %v1870 = vpop.f32.mrb[0].mxu0
        %v1871 = vadd.f32 0.0, %v1870
        %v1872 = vpop.f32.mrb[0].mxu0
        %1873 = vdwg.mxu0
        %v1874 = vadd.f32 %v1798, %v1871
        %v1876 = vsel %vm508, %v1648, 0
        %1878 = vmatprep.subr.mxu0 0.0
        %1879 = vmatpush1.msra.mxu0 %v1654
        %1880 = vmatprep.subr.mxu0 0.0
        %1881 = vmatpush1.msra.mxu0 0.0
        %1882 = vmatprep.subr.mxu0 0.0
        %1883 = vmatpush1.msra.mxu0 0.0
        %1884 = vmatprep.subr.mxu0 0.0
        %1885 = vmatpush1.msra.mxu0 0.0
        %1886 = vmatprep.subr.mxu0 0.0
        %1887 = vmatpush1.msra.mxu0 0.0
        %1888 = vmatprep.subr.mxu0 0.0
        %1889 = vmatpush1.msra.mxu0 0.0
        %1890 = vmatprep.subr.mxu0 0.0
        %1891 = vmatpush1.msra.mxu0 0.0
        %1892 = vmatprep.subr.mxu0 0.0
        %1893 = vmatpush1.msra.mxu0 0.0
        %1894 = vmatprep.subr.mxu0 0.0
        %1895 = vmatpush1.msra.mxu0 0.0
        %1896 = vmatprep.subr.mxu0 0.0
        %1897 = vmatpush1.msra.mxu0 0.0
        %1898 = vmatprep.subr.mxu0 0.0
        %1899 = vmatpush1.msra.mxu0 0.0
        %1900 = vmatprep.subr.mxu0 0.0
        %1901 = vmatpush1.msra.mxu0 0.0
        %1902 = vmatprep.subr.mxu0 0.0
        %1903 = vmatpush1.msra.mxu0 0.0
        %1904 = vmatprep.subr.mxu0 0.0
        %1905 = vmatpush1.msra.mxu0 0.0
        %1906 = vmatprep.subr.mxu0 0.0
        %1907 = vmatpush1.msra.mxu0 0.0
        %1908 = vmatprep.subr.mxu0 0.0
        %1909 = vmatpush1.msra.mxu0 0.0
        %1910 = vmatprep.subr.mxu0 0.0
        %1911 = vmatpush1.msra.mxu0 0.0
        %1912 = vmatprep.subr.mxu0 0.0
        %1913 = vmatpush1.msra.mxu0 0.0
        %1914 = vmatprep.subr.mxu0 0.0
        %1915 = vmatpush1.msra.mxu0 0.0
        %1916 = vmatprep.subr.mxu0 0.0
        %1917 = vmatpush1.msra.mxu0 0.0
        %1918 = vmatprep.subr.mxu0 0.0
        %1919 = vmatpush1.msra.mxu0 0.0
        %1920 = vmatprep.subr.mxu0 0.0
        %1921 = vmatpush1.msra.mxu0 0.0
        %1922 = vmatprep.subr.mxu0 0.0
        %1923 = vmatpush1.msra.mxu0 0.0
        %1924 = vmatprep.subr.mxu0 0.0
        %1925 = vmatpush1.msra.mxu0 0.0
        %1926 = vmatprep.subr.mxu0 0.0
        %1927 = vmatpush1.msra.mxu0 0.0
        %1928 = vmatprep.subr.mxu0 0.0
        %1929 = vmatpush1.msra.mxu0 0.0
        %1930 = vmatprep.subr.mxu0 0.0
        %1931 = vmatpush1.msra.mxu0 0.0
        %1932 = vmatprep.subr.mxu0 0.0
        %1933 = vmatpush1.msra.mxu0 0.0
        %1934 = vmatprep.subr.mxu0 0.0
        %1935 = vmatpush1.msra.mxu0 0.0
        %1936 = vmatprep.subr.mxu0 0.0
        %1937 = vmatpush1.msra.mxu0 0.0
        %1938 = vmatprep.subr.mxu0 0.0
        %1939 = vmatpush1.msra.mxu0 0.0
        %1940 = vmatprep.subr.mxu0 0.0
        %1941 = vmatpush1.msra.mxu0 0.0
        %1942 = vmatprep.mubr.f32.mxu0 0.0
        %1943 = vmatmul.mubr.f32.gmra.mrb[0].mxu0 %v1876
        %v1944 = vpop.f32.mrb[0].mxu0
        %v1945 = vadd.f32 0.0, %v1944
        %v1946 = vpop.f32.mrb[0].mxu0
        %1947 = vdwg.mxu0
        %v1948 = vadd.f32 %v1874, %v1945
        %v1949 = vld [vmem:[%s10] sm:$0x1]
        %v1951 = vlaneseq
        %v1952 = vshrl.u32 %v1951, 7
        %v1953 = vsub.s32 0, %v1952
        %v1954 = vrot.slane %v1949, %v1953
        %v1956 = vadd.f32 %v1948, %v1954
        %1957 = vst.msk [vmem:[%s416] sm:$0xff] %vm422, %v1956
        %s1958 = sand.u32 %s273, 1
        %s1959 = scalar_lea.sflag [#allocation4], %s1958
        %s1960 = sand.u32 %s273, 1
        %s1961 = smul.addr %s1960, 8
        %s1962 = scalar_lea.vmem [#allocation7], %s1961
        // Predicated region
        $region73: #{tpu_custom_call.1} parent=63 // pred_check
          %p1963 = pneg %p283
        $region74: #{tpu_custom_call.1} parent=63 // pred_check_branch
          %1965 = sbr.rel (%p1963) target = $region76
        $region75: #{tpu_custom_call.1} parent=63 // pred_region
          %s1967 = ssub.s32 128, 128
          %1968 = vsyncadd %s1959, %s1967
          %s1969 = smul.addr %s29, 128
          %s1970 = scalar_lea.hbm %s11, %s1969
          %s1972 = sshll.u32 %s1962, 4
          %s1973 = int_to_ptr.vmem [resolvable:$true] %s1972
          %1975 = dma.vmem_to_hbm [thread:$0]  %s1973, 128, %s1970, %s1959
        $region76: #{tpu_custom_call.1} parent=63 // pred_fallthru
          _
      $region64: #{tpu_custom_call.1} parent=5 // pred_fallthru
        _
      %p1976 = scmp.le.s32.totalorder 2, %s24
      // Predicated region
      $region77: #{tpu_custom_call.1} parent=5 // pred_check
        %p1977 = pneg %p1976
      $region78: #{tpu_custom_call.1} parent=5 // pred_check_branch
        %1979 = sbr.rel (%p1977) target = $region80
      $region79: #{tpu_custom_call.1} parent=5 // pred_region
        %s1980 = ssub.s32 %s24, 2
        // Predicated region
        $region81: #{tpu_custom_call.1} parent=79 // pred_check
          %p1981 = pneg %p289
        $region82: #{tpu_custom_call.1} parent=79 // pred_check_branch
          %1983 = sbr.rel (%p1981) target = $region84
        $region83: #{tpu_custom_call.1} parent=79 // pred_region
          %s1984 = sand.u32 %s274, 1
          %s1985 = scalar_lea.sflag [#allocation4], %s1984
          %s1986 = sand.u32 %s274, 1
          %s1987 = smul.addr %s1986, 8
          %s1988 = scalar_lea.vmem [#allocation7], %s1987
          %1989 = dma.done %s1985, 128
        $region84: #{tpu_custom_call.1} parent=79 // pred_fallthru
          _
      $region80: #{tpu_custom_call.1} parent=5 // pred_fallthru
        _
    $region6: #{tpu_custom_call.1} parent=1 // loop_footer
      %s28 = sadd.s32 1, %s24
    $region7: #{tpu_custom_call.1} parent=1 // loop_footer_branch
      %23 = sbr.rel target = $region3
    $region8: #{tpu_custom_call.1} parent=1 // loop_exit
      _
    %1990 = vsyncpa [#allocation3], 1
    %s1991 = scalar_lea.sflag [#allocation3], 1
    %1992 = vsyncpa %s1991, 1
    %1993 = vsyncpa [#allocation6], 1
    %1994 = vsyncpa [#allocation4], 1
    %s1995 = scalar_lea.sflag [#allocation4], 1
    %1996 = vsyncpa %s1995, 1

</llo_original>
